<compile_context>
chip_gen: v6e
topology: v6e:2x2x1
jax: 0.10.0
libtpu: 0.0.40
codegen_flags: <defaults>
</compile_context>

<pallas_src>
import functools
import math

import numpy as np
import jax
import jax.numpy as jnp
from jax.experimental import pallas as pl
from jax.experimental.pallas import tpu as pltpu


def _ffn_kernel(gid_ref, x_ref, wgu_ref, wd_ref, o_ref, acc_ref, *, ti):
    # gid_ref: scalar-prefetched (SMEM) per-tile group ids -- only consumed by index_maps.
    del gid_ref
    l = pl.program_id(1)

    @pl.when(l == 0)
    def _init():
        acc_ref[...] = jnp.zeros_like(acc_ref)

    x = x_ref[...]                                   # (tm, H)
    wgu = wgu_ref[...]                               # (H, 2*ti)  = [gate chunk | up chunk]
    gu = jnp.dot(x, wgu, preferred_element_type=jnp.float32)      # (tm, 2*ti), f32
    gate = gu[:, :ti]
    up = gu[:, ti:]
    h = (gate * jax.nn.sigmoid(gate)) * up           # SiLU(gate) * up, f32
    # down-proj partial product for this I chunk; accumulate in f32 VMEM scratch.
    acc_ref[...] += jnp.dot(h.astype(wd_ref.dtype), wd_ref[...],
                            preferred_element_type=jnp.float32)

    @pl.when(l == pl.num_programs(1) - 1)
    def _store():
        o_ref[...] = acc_ref[...].astype(o_ref.dtype)


def grouped_ffn(x, batch_sizes, w_gate, w_up, w_down, *, tm=256, ti=None,
                compute_dtype=None, vmem_limit_bytes=64 * 1024 * 1024):
    """x: (S, H); batch_sizes: (G,) int (ragged OK, sum == S);
    w_gate/w_up: (G, H, I); w_down: (G, I, H).  Returns (S, H) in x.dtype.

    tm: row tile (MXU height; 128 on v5e, 256 on v6e/v7x).
    ti: intermediate chunk (multiple of 128; size per-generation to VMEM budget).
    compute_dtype: e.g. jnp.bfloat16 to run the matmuls in bf16 with f32 accumulation.
    """
    S, H = x.shape
    G, H2, I = w_gate.shape
    assert H2 == H and w_up.shape == (G, H, I) and w_down.shape == (G, I, H)
    assert tm % 8 == 0

    if ti is None:
        ti = min(512, I)
    ti = min(ti, I)
    assert I % ti == 0, "intermediate_size must be divisible by ti"
    assert ti % 8 == 0 and (2 * ti) % 128 == 0

    out_dtype = x.dtype
    if compute_dtype is not None:
        x = x.astype(compute_dtype)
        w_gate = w_gate.astype(compute_dtype)
        w_up = w_up.astype(compute_dtype)
        w_down = w_down.astype(compute_dtype)

    # --- pad each group's rows up to a multiple of tm (handles ragged MoE routing) ---
    bs = np.asarray(batch_sizes, dtype=np.int64)
    assert int(bs.sum()) == S, "batch_sizes must sum to number of tokens"
    tiles_per_group = (bs + tm - 1) // tm
    padded_sizes = tiles_per_group * tm
    padded_offsets = np.concatenate([[0], np.cumsum(padded_sizes)])
    num_tiles = int(tiles_per_group.sum())
    S_pad = num_tiles * tm

    dst_rows = np.concatenate(
        [padded_offsets[g] + np.arange(bs[g]) for g in range(G)]
    ).astype(np.int32)
    dst_rows = jnp.asarray(dst_rows)

    # Zero-padded rows produce zero output and are dropped below.
    x_pad = jnp.zeros((S_pad, H), x.dtype).at[dst_rows].set(x)

    # Per-row-tile group id (static glue from batch_sizes), scalar-prefetched into SMEM.
    group_ids = jnp.asarray(
        np.repeat(np.arange(G, dtype=np.int32), tiles_per_group), dtype=jnp.int32)

    # --- pre-pack gate/up chunk-interleaved so each I chunk is ONE wide matmul ---
    nI = I // ti
    w_gu = jnp.concatenate(
        [w_gate.reshape(G, H, nI, ti), w_up.reshape(G, H, nI, ti)], axis=-1
    ).reshape(G, H, 2 * I)

    grid_spec = pltpu.PrefetchScalarGridSpec(
        num_scalar_prefetch=1,
        grid=(num_tiles, nI),
        in_specs=[
            # x row tile: constant across the I axis (DMA'd once per row tile).
            pl.BlockSpec((tm, H), lambda i, l, gid: (i, 0)),
            # fused gate|up weight chunk of the tile's expert.
            pl.BlockSpec((pl.Squeezed(), H, 2 * ti), lambda i, l, gid: (gid[i], 0, l)),
            # down weight chunk of the tile's expert.
            pl.BlockSpec((pl.Squeezed(), ti, H), lambda i, l, gid: (gid[i], l, 0)),
        ],
        out_specs=pl.BlockSpec((tm, H), lambda i, l, gid: (i, 0)),
        scratch_shapes=[pltpu.VMEM((tm, H), jnp.float32)],
    )

    dsz = jnp.dtype(x.dtype).itemsize
    cost = pl.CostEstimate(
        flops=6 * S_pad * H * I,
        transcendentals=S_pad * I,
        bytes_accessed=(2 * S_pad * H + 3 * G * H * I) * dsz,
    )

    out_pad = pl.pallas_call(
        functools.partial(_ffn_kernel, ti=ti),
        out_shape=jax.ShapeDtypeStruct((S_pad, H), out_dtype),
        grid_spec=grid_spec,
        compiler_params=pltpu.CompilerParams(
            dimension_semantics=("parallel", "arbitrary"),
            vmem_limit_bytes=vmem_limit_bytes,
        ),
        cost_estimate=cost,
    )(group_ids, x_pad, w_gu, w_down)

    # Drop the padded rows.
    return out_pad[dst_rows]


def grouped_ffn_reference(x, batch_sizes, w_gate, w_up, w_down):
    """Float64 numpy reference matching GroupedGemm 'gmm' SwiGLU semantics."""
    x = np.asarray(x, dtype=np.float64)
    wg = np.asarray(w_gate, dtype=np.float64)
    wu = np.asarray(w_up, dtype=np.float64)
    wd = np.asarray(w_down, dtype=np.float64)
    outs = []
    off = 0
    for g in range(wg.shape[0]):
        n = int(batch_sizes[g])
        xg = x[off:off + n]
        gate = xg @ wg[g]
        up = xg @ wu[g]
        silu = gate * (1.0 / (1.0 + np.exp(-gate)))
        outs.append((silu * up) @ wd[g])
        off += n
    return np.concatenate(outs, axis=0)


def _kaiming_uniform(key, shape, fan_in):
    # Mirrors nn.init.kaiming_uniform_(a=sqrt(5)) -> bound = 1/sqrt(fan_in).
    bound = 1.0 / math.sqrt(fan_in)
    return jax.random.uniform(key, shape, dtype=jnp.float32, minval=-bound, maxval=bound)


if __name__ == "__main__":
    # Small-but-representative config consistent with DeepseekV3GroupedFFN(hidden_size,
    # intermediate_size, bias=False, num_groups, multiple_of=1, hidden_act='silu',
    # mlp_layer_fusion=False).  batch_sizes are intentionally ragged (not tile-aligned).
    hidden_size = 256
    intermediate_size = 512
    num_groups = 3
    batch_sizes = np.array([96, 200, 56], dtype=np.int32)   # per-group token counts (gmm)
    total_tokens = int(batch_sizes.sum())                    # 352

    key = jax.random.PRNGKey(0)
    kx, kg, ku, kd = jax.random.split(key, 4)

    x = jax.random.normal(kx, (total_tokens, hidden_size), dtype=jnp.float32)

    # GroupedLinear weights: stored as (num_groups*in, out), used as (num_groups, in, out).
    w_gate = _kaiming_uniform(kg, (num_groups, hidden_size, intermediate_size),
                              fan_in=intermediate_size)
    w_up = _kaiming_uniform(ku, (num_groups, hidden_size, intermediate_size),
                            fan_in=intermediate_size)
    w_down = _kaiming_uniform(kd, (num_groups, intermediate_size, hidden_size),
                              fan_in=hidden_size)

    ref = grouped_ffn_reference(x, batch_sizes, w_gate, w_up, w_down)

    # f32 compute path (tight correctness check).  tm=128 keeps the test small; on v6e/v7x
    # production shapes use tm=256 and a ti sized to the generation's VMEM (see grouped_ffn).
    out = grouped_ffn(x, batch_sizes, w_gate, w_up, w_down, tm=128, ti=256)
    out = jax.block_until_ready(out)
    np.testing.assert_allclose(np.asarray(out), ref, rtol=1e-3, atol=1e-3)

    # bf16 weights/activations with f32 accumulation (recommended production setting).
    out_bf16 = grouped_ffn(x, batch_sizes, w_gate, w_up, w_down, tm=128, ti=256,
                           compute_dtype=jnp.bfloat16)
    out_bf16 = jax.block_until_ready(out_bf16)
    np.testing.assert_allclose(np.asarray(out_bf16), ref, rtol=5e-2, atol=5e-2)

    print("KERNEL_OK")
</pallas_src>

<mosaic_0001>
module attributes {stable_mosaic.version = 11 : i64} {
  func.func @_ffn_kernel(%arg0: i32, %arg1: i32, %arg2: memref<4xi32, #tpu.memory_space<smem>>, %arg3: memref<128x256xf32, #tpu.memory_space<vmem>>, %arg4: memref<1x256x512xf32, #tpu.memory_space<vmem>>, %arg5: memref<1x256x256xf32, #tpu.memory_space<vmem>>, %arg6: memref<128x256xf32, #tpu.memory_space<vmem>>, %arg7: memref<128x256xf32, #tpu.memory_space<vmem>>) attributes {dimension_semantics = [#tpu.dimension_semantics<parallel>, #tpu.dimension_semantics<arbitrary>], iteration_bounds = array<i64: 4, 2>, scalar_prefetch = 1 : i64, scratch_operands = 1 : i64, tpu.core_type = #tpu.core_type<tc>, window_params = [{transform_indices = @transform_0, window_bounds = array<i64: 128, 256>}, {transform_indices = @transform_1, window_bounds = array<i64: 1, 256, 512>}, {transform_indices = @transform_2, window_bounds = array<i64: 1, 256, 256>}, {transform_indices = @transform_3, window_bounds = array<i64: 128, 256>}]} {
    %c0_i32 = arith.constant 0 : i32
    %0 = arith.cmpi eq, %arg1, %c0_i32 : i32
    %1 = arith.extui %0 : i1 to i32
    %c0_i32_0 = arith.constant 0 : i32
    %2 = arith.cmpi ne, %1, %c0_i32_0 : i32
    scf.if %2 {
      %cst_15 = arith.constant 0.000000e+00 : f32
      %25 = vector.broadcast %cst_15 : f32 to vector<128x256xf32>
      %c0_16 = arith.constant 0 : index
      %c0_17 = arith.constant 0 : index
      %26 = vector.load %arg7[%c0_16, %c0_17] : memref<128x256xf32, #tpu.memory_space<vmem>>, vector<128x256xf32>
      tpu.vector_store %arg7[%c0_16, %c0_17], %25 {strides = array<i32>} : memref<128x256xf32, #tpu.memory_space<vmem>>, vector<128x256xf32>,
    } else {
    }
    %c0 = arith.constant 0 : index
    %c0_1 = arith.constant 0 : index
    %3 = vector.load %arg3[%c0, %c0_1] : memref<128x256xf32, #tpu.memory_space<vmem>>, vector<128x256xf32>
    %c0_2 = arith.constant 0 : index
    %c0_3 = arith.constant 0 : index
    %c0_4 = arith.constant 0 : index
    %4 = vector.load %arg4[%c0_2, %c0_3, %c0_4] : memref<1x256x512xf32, #tpu.memory_space<vmem>>, vector<1x256x512xf32>
    %5 = vector.shape_cast %4 : vector<1x256x512xf32> to vector<256x512xf32>
    %cst = arith.constant dense<0.000000e+00> : vector<128x512xf32>
    %6 = tpu.matmul %3, %5, %cst {dimension_numbers = #tpu.dot_dimension_numbers<[1], [0], [0], [1], [0, 0, 1, 1], [], []>} : vector<128x256xf32>, vector<256x512xf32>, vector<128x512xf32> -> vector<128x512xf32>
    %7 = vector.extract_strided_slice %6 {offsets = [0, 0], sizes = [128, 256], strides = [1, 1]} : vector<128x512xf32> to vector<128x256xf32>
    %8 = vector.extract_strided_slice %6 {offsets = [0, 256], sizes = [128, 256], strides = [1, 1]} : vector<128x512xf32> to vector<128x256xf32>
    %9 = arith.negf %7 : vector<128x256xf32>
    %10 = math.exp %9 : vector<128x256xf32>
    %cst_5 = arith.constant 1.000000e+00 : f32
    %11 = vector.broadcast %cst_5 : f32 to vector<128x256xf32>
    %12 = arith.addf %11, %10 : vector<128x256xf32>
    %13 = arith.divf %11, %12 : vector<128x256xf32>
    %14 = arith.mulf %7, %13 : vector<128x256xf32>
    %15 = arith.mulf %14, %8 : vector<128x256xf32>
    %c0_6 = arith.constant 0 : index
    %c0_7 = arith.constant 0 : index
    %16 = vector.load %arg7[%c0_6, %c0_7] : memref<128x256xf32, #tpu.memory_space<vmem>>, vector<128x256xf32>
    %c0_8 = arith.constant 0 : index
    %c0_9 = arith.constant 0 : index
    %c0_10 = arith.constant 0 : index
    %17 = vector.load %arg5[%c0_8, %c0_9, %c0_10] : memref<1x256x256xf32, #tpu.memory_space<vmem>>, vector<1x256x256xf32>
    %18 = vector.shape_cast %17 : vector<1x256x256xf32> to vector<256x256xf32>
    %cst_11 = arith.constant dense<0.000000e+00> : vector<128x256xf32>
    %19 = tpu.matmul %15, %18, %cst_11 {dimension_numbers = #tpu.dot_dimension_numbers<[1], [0], [0], [1], [0, 0, 1, 1], [], []>} : vector<128x256xf32>, vector<256x256xf32>, vector<128x256xf32> -> vector<128x256xf32>
    %20 = arith.addf %16, %19 : vector<128x256xf32>
    %c0_12 = arith.constant 0 : index
    %c0_13 = arith.constant 0 : index
    %21 = vector.load %arg7[%c0_12, %c0_13] : memref<128x256xf32, #tpu.memory_space<vmem>>, vector<128x256xf32>
    tpu.vector_store %arg7[%c0_12, %c0_13], %20 {strides = array<i32>} : memref<128x256xf32, #tpu.memory_space<vmem>>, vector<128x256xf32>,
    %c1_i32 = arith.constant 1 : i32
    %22 = arith.cmpi eq, %arg1, %c1_i32 : i32
    %23 = arith.extui %22 : i1 to i32
    %c0_i32_14 = arith.constant 0 : i32
    %24 = arith.cmpi ne, %23, %c0_i32_14 : i32
    scf.if %24 {
      %c0_15 = arith.constant 0 : index
      %c0_16 = arith.constant 0 : index
      %25 = vector.load %arg7[%c0_15, %c0_16] : memref<128x256xf32, #tpu.memory_space<vmem>>, vector<128x256xf32>
      %c0_17 = arith.constant 0 : index
      %c0_18 = arith.constant 0 : index
      %26 = vector.load %arg6[%c0_17, %c0_18] : memref<128x256xf32, #tpu.memory_space<vmem>>, vector<128x256xf32>
      tpu.vector_store %arg6[%c0_17, %c0_18], %25 {strides = array<i32>} : memref<128x256xf32, #tpu.memory_space<vmem>>, vector<128x256xf32>,
    } else {
    }
    return
  }
  func.func @transform_0(%arg0: i32, %arg1: i32, %arg2: memref<4xi32, #tpu.memory_space<smem>>) -> (i32, i32) {
    %c0_i32 = arith.constant 0 : i32
    %c0_i32_0 = arith.constant 0 : i32
    return %arg0, %c0_i32 : i32, i32
  }
  func.func @transform_1(%arg0: i32, %arg1: i32, %arg2: memref<4xi32, #tpu.memory_space<smem>>) -> (i32, i32, i32) {
    %0 = arith.index_cast %arg0 : i32 to index
    %1 = memref.load %arg2[%0] : memref<4xi32, #tpu.memory_space<smem>>
    %c0_i32 = arith.constant 0 : i32
    %c0_i32_0 = arith.constant 0 : i32
    return %1, %c0_i32, %arg1 : i32, i32, i32
  }
  func.func @transform_2(%arg0: i32, %arg1: i32, %arg2: memref<4xi32, #tpu.memory_space<smem>>) -> (i32, i32, i32) {
    %0 = arith.index_cast %arg0 : i32 to index
    %1 = memref.load %arg2[%0] : memref<4xi32, #tpu.memory_space<smem>>
    %c0_i32 = arith.constant 0 : i32
    %c0_i32_0 = arith.constant 0 : i32
    return %1, %arg1, %c0_i32 : i32, i32, i32
  }
  func.func @transform_3(%arg0: i32, %arg1: i32, %arg2: memref<4xi32, #tpu.memory_space<smem>>) -> (i32, i32) {
    %c0_i32 = arith.constant 0 : i32
    %c0_i32_0 = arith.constant 0 : i32
    return %arg0, %c0_i32 : i32, i32
  }
}

</mosaic_0001>

<llo_original>
// kernel: tpu_custom_call.1
$region0: #{tpu_custom_call.1}
  #allocation0 [shape = 'u32[]', space=smem, size = 0x4, offset = 0x4, fixed_abs, tag = 'smem constant byte address 0x4 - core index']
  #allocation1 [shape = 'u32[144,128]{1,0:T(1,128)}', space=vmem, size = 0x12000, scoped, tag = 'internal scratch']
  #allocation2 [shape = 'f32[128,256]{1,0:T(8,128)}', space=vmem, size = 0x20000, scoped, tag = 'scratch operand']
  #allocation3 [shape = 's32[1]{0}', space=sflag, size = 0x4, scoped, tag = 'scoped memory for tpu_custom_call.1']
  #allocation4 [shape = 'u8[512]{0}', space=smem, size = 0x200, scoped, tag = 'prefetched SMEM operand 0']
  %s0 = inlined_call_operand.hbm [shape: s32[4], index: 0, kind: input, shape index: {}]
  %s1 = inlined_call_operand.hbm [shape: f32[512,256], index: 1, kind: input, shape index: {}]
  %s2 = inlined_call_operand.hbm [shape: f32[3,256,1024], index: 2, kind: input, shape index: {}]
  %s3 = inlined_call_operand.hbm [shape: f32[3,512,256], index: 3, kind: input, shape index: {}]
  %s4 = inlined_call_operand.hbm [shape: f32[512,256], index: 4, kind: output, shape index: {}]
  %s5 = sld [smem:[#allocation0]]
  $region65: #{tpu_custom_call.1} parent=0
    _
  %s7 = ssub.s32 1, %s5
  %s8 = scalar_select 0, %s7, %s5
  %10 = dma.hbm_to_smem %s0, 16, [#allocation4], [#allocation3]
  %11 = dma.done [#allocation3], 16
  %12 = sfence
  $region1: #{tpu_custom_call.1} parent=0
    #allocation5 [shape = 'u8[262144]{0}', space=vmem, size = 0x40000, scoped, tag = 'input window, operand 1']
    #allocation6 [shape = 's32[2]{0}', space=sflag, size = 0x8, scoped, tag = 'scoped memory for tpu_custom_call.1']
    #allocation7 [shape = 's32[2]{0}', space=sflag, size = 0x8, scoped, tag = 'scoped memory for tpu_custom_call.1']
    #allocation8 [shape = 'u8[1048576]{0}', space=vmem, size = 0x100000, scoped, tag = 'input window, operand 2']
    #allocation9 [shape = 's32[2]{0}', space=sflag, size = 0x8, scoped, tag = 'scoped memory for tpu_custom_call.1']
    #allocation10 [shape = 'u8[524288]{0}', space=vmem, size = 0x80000, scoped, tag = 'input window, operand 3']
    #allocation11 [shape = 'u8[262144]{0}', space=vmem, size = 0x40000, scoped, tag = 'output window, operand 0']
    %13 = vsyncpa [#allocation6], 0
    %s14 = scalar_lea.sflag [#allocation6], 1
    %15 = vsyncpa %s14, 0
    %16 = vsyncpa [#allocation9], 0
    %s17 = scalar_lea.sflag [#allocation9], 1
    %18 = vsyncpa %s17, 0
    %19 = vsyncpa [#allocation7], 0
    %s20 = scalar_lea.sflag [#allocation7], 1
    %21 = vsyncpa %s20, 0
    loop: start=0, step=1, limit=10
    $region2: #{tpu_custom_call.1} parent=1 // loop_pre_header
      _
    $region3: #{tpu_custom_call.1} parent=1 // loop_header
      %s23 = sphi 0, %s27
      %p24 = scmp.ge.s32.totalorder %s23, 10
      %s30 = sphi 0, %s42
      %s31 = sphi 0, %s38
      %s32 = sphi 0, %s30
      %s33 = sphi 0, %s31
      %s34 = sphi 0, %s32
      %s35 = sphi 0, %s33
      %s45 = sphi 0, %s47
      %s48 = sphi 0, %s45
      %s49 = sphi 0, %s48
      %s65 = sphi 0, %s49
      %s75 = sphi 0, %s77
      %s78 = sphi 0, %s75
      %s79 = sphi 0, %s78
      %s95 = sphi 0, %s79
      %s105 = sphi 0, %s107
      %s108 = sphi 0, %s105
      %s109 = sphi 0, %s108
      %s125 = sphi 0, %s109
      %s131 = sphi 0, %s133
      %s134 = sphi 0, %s131
      %s135 = sphi 0, %s134
      %s151 = sphi 0, %s135
    $region4: #{tpu_custom_call.1} parent=1 // loop_header_branch
      %26 = sbr.rel (%p24) target = $region8
    $region5: #{tpu_custom_call.1} parent=1 // loop_body
      %s28 = ssub.s32 %s23, 1
      %s29 = ssub.s32 %s23, 2
      %s36 = sadd.s32 1, %s31
      %p37 = scmp.ge.s32.totalorder %s36, 2
      %s38 = scalar_select %p37, 0, %s36
      %s39 = sadd.s32 1, %s30
      %s40 = scalar_select %p37, %s39, %s30
      %p41 = scmp.ge.s32.totalorder %s40, 4
      %s42 = scalar_select %p41, 0, %s40
      %s43 = ssub.s32 %s30, %s42
      %p44 = scmp.eq.s32.totalorder %s43, 0
      %s46 = sadd.s32 %s45, 1
      %s47 = scalar_select %p44, %s45, %s46
      %p50 = pneg %p44
      %p51 = scmp.eq.s32.totalorder %s23, 7
      %p52 = por %p50, %p51
      %p53 = scmp.ne.s32.totalorder %s45, %s48
      %p54 = scmp.eq.s32.totalorder %s23, 0
      %p55 = por %p53, %p54
      %p56 = scmp.ne.s32.totalorder %s45, %s48
      %p57 = scmp.eq.s32.totalorder %s28, 7
      %p58 = por %p56, %p57
      %p59 = scmp.ne.s32.totalorder %s48, %s49
      %p60 = scmp.eq.s32.totalorder %s28, 0
      %p61 = por %p59, %p60
      %p62 = scmp.ne.s32.totalorder %s48, %s49
      %p63 = scmp.eq.s32.totalorder %s29, 7
      %p64 = por %p62, %p63
      %p66 = scmp.ne.s32.totalorder %s49, %s65
      %p67 = scmp.eq.s32.totalorder %s29, 0
      %p68 = por %p66, %p67
      %s69 = sld [smem:[#allocation4 + %s30]]
      %s70 = sld [smem:[#allocation4 + %s42]]
      %s71 = ssub.s32 %s69, %s70
      %s72 = ssub.s32 %s31, %s38
      %s73 = sor.u32 %s71, %s72
      %p74 = scmp.eq.s32.totalorder %s73, 0
      %s76 = sadd.s32 %s75, 1
      %s77 = scalar_select %p74, %s75, %s76
      %p80 = pneg %p74
      %p81 = scmp.eq.s32.totalorder %s23, 7
      %p82 = por %p80, %p81
      %p83 = scmp.ne.s32.totalorder %s75, %s78
      %p84 = scmp.eq.s32.totalorder %s23, 0
      %p85 = por %p83, %p84
      %p86 = scmp.ne.s32.totalorder %s75, %s78
      %p87 = scmp.eq.s32.totalorder %s28, 7
      %p88 = por %p86, %p87
      %p89 = scmp.ne.s32.totalorder %s78, %s79
      %p90 = scmp.eq.s32.totalorder %s28, 0
      %p91 = por %p89, %p90
      %p92 = scmp.ne.s32.totalorder %s78, %s79
      %p93 = scmp.eq.s32.totalorder %s29, 7
      %p94 = por %p92, %p93
      %p96 = scmp.ne.s32.totalorder %s79, %s95
      %p97 = scmp.eq.s32.totalorder %s29, 0
      %p98 = por %p96, %p97
      %s99 = sld [smem:[#allocation4 + %s30]]
      %s100 = sld [smem:[#allocation4 + %s42]]
      %s101 = ssub.s32 %s99, %s100
      %s102 = ssub.s32 %s31, %s38
      %s103 = sor.u32 %s101, %s102
      %p104 = scmp.eq.s32.totalorder %s103, 0
      %s106 = sadd.s32 %s105, 1
      %s107 = scalar_select %p104, %s105, %s106
      %p110 = pneg %p104
      %p111 = scmp.eq.s32.totalorder %s23, 7
      %p112 = por %p110, %p111
      %p113 = scmp.ne.s32.totalorder %s105, %s108
      %p114 = scmp.eq.s32.totalorder %s23, 0
      %p115 = por %p113, %p114
      %p116 = scmp.ne.s32.totalorder %s105, %s108
      %p117 = scmp.eq.s32.totalorder %s28, 7
      %p118 = por %p116, %p117
      %p119 = scmp.ne.s32.totalorder %s108, %s109
      %p120 = scmp.eq.s32.totalorder %s28, 0
      %p121 = por %p119, %p120
      %p122 = scmp.ne.s32.totalorder %s108, %s109
      %p123 = scmp.eq.s32.totalorder %s29, 7
      %p124 = por %p122, %p123
      %p126 = scmp.ne.s32.totalorder %s109, %s125
      %p127 = scmp.eq.s32.totalorder %s29, 0
      %p128 = por %p126, %p127
      %s129 = ssub.s32 %s30, %s42
      %p130 = scmp.eq.s32.totalorder %s129, 0
      %s132 = sadd.s32 %s131, 1
      %s133 = scalar_select %p130, %s131, %s132
      %p136 = pneg %p130
      %p137 = scmp.eq.s32.totalorder %s23, 7
      %p138 = por %p136, %p137
      %p139 = scmp.ne.s32.totalorder %s131, %s134
      %p140 = scmp.eq.s32.totalorder %s23, 0
      %p141 = por %p139, %p140
      %p142 = scmp.ne.s32.totalorder %s131, %s134
      %p143 = scmp.eq.s32.totalorder %s28, 7
      %p144 = por %p142, %p143
      %p145 = scmp.ne.s32.totalorder %s134, %s135
      %p146 = scmp.eq.s32.totalorder %s28, 0
      %p147 = por %p145, %p146
      %p148 = scmp.ne.s32.totalorder %s134, %s135
      %p149 = scmp.eq.s32.totalorder %s29, 7
      %p150 = por %p148, %p149
      %p152 = scmp.ne.s32.totalorder %s135, %s151
      %p153 = scmp.eq.s32.totalorder %s29, 0
      %p154 = por %p152, %p153
      %p155 = scmp.le.s32.totalorder 1, %s23
      %p156 = scmp.lt.s32.totalorder %s23, 9
      %p157 = pnand %p155, %p156
      %p158 = pneg %p157
      // Predicated region
      $region9: #{tpu_custom_call.1} parent=5 // pred_check
        _
      $region10: #{tpu_custom_call.1} parent=5 // pred_check_branch
        %160 = sbr.rel (%p157) target = $region12
      $region11: #{tpu_custom_call.1} parent=5 // pred_region
        %s161 = ssub.s32 %s23, 1
      $region12: #{tpu_custom_call.1} parent=5 // pred_fallthru
        _
      %p162 = scmp.lt.s32.totalorder %s23, 8
      // Predicated region
      $region13: #{tpu_custom_call.1} parent=5 // pred_check
        %p163 = pneg %p162
      $region14: #{tpu_custom_call.1} parent=5 // pred_check_branch
        %165 = sbr.rel (%p163) target = $region16
      $region15: #{tpu_custom_call.1} parent=5 // pred_region
        // Predicated region
        $region17: #{tpu_custom_call.1} parent=15 // pred_check
          %p166 = pneg %p55
        $region18: #{tpu_custom_call.1} parent=15 // pred_check_branch
          %168 = sbr.rel (%p166) target = $region20
        $region19: #{tpu_custom_call.1} parent=15 // pred_region
          %s169 = sand.u32 %s45, 1
          %s170 = scalar_lea.sflag [#allocation6], %s169
          %s171 = sand.u32 %s45, 1
          %s172 = smul.addr %s171, 256
          %s173 = scalar_lea.vmem [#allocation5], %s172
          %s174 = smul.u32 16, %s30
          %s176 = ssub.s32 4096, 4096
          %177 = vsyncadd %s170, %s176
          %s178 = smul.addr %s174, 2
          %s179 = smul.addr %s178, 128
          %s180 = scalar_lea.hbm %s1, %s179
          %s181 = sshll.u32 %s173, 4
          %s182 = int_to_ptr.vmem [resolvable:$true] %s181
          %187 = dma.hbm_to_vmem [thread:$0]  %s180, 4096, %s182, %s170, 256, 256, 16
        $region20: #{tpu_custom_call.1} parent=15 // pred_fallthru
          _
        // Predicated region
        $region21: #{tpu_custom_call.1} parent=15 // pred_check
          %p188 = pneg %p85
        $region22: #{tpu_custom_call.1} parent=15 // pred_check_branch
          %190 = sbr.rel (%p188) target = $region24
        $region23: #{tpu_custom_call.1} parent=15 // pred_region
          %s191 = sand.u32 %s23, 1
          %s192 = scalar_lea.sflag [#allocation9], %s191
          %s193 = sand.u32 %s75, 1
          %s194 = smul.addr %s193, 1024
          %s195 = scalar_lea.vmem [#allocation8], %s194
          %s196 = sld [smem:[#allocation4 + %s30]]
          %s197 = smul.u32 4, %s31
          %s199 = ssub.s32 16384, 16384
          %200 = vsyncadd %s192, %s199
          %s201 = smul.addr %s196, 256
          %s202 = sadd.s32 %s197, %s201
          %s203 = smul.addr %s202, 128
          %s204 = scalar_lea.hbm %s2, %s203
          %s205 = sshll.u32 %s195, 4
          %s206 = int_to_ptr.vmem [resolvable:$true] %s205
          %211 = dma.hbm_to_vmem [thread:$0]  %s204, 16384, %s206, %s192, 1024, 512, 32
        $region24: #{tpu_custom_call.1} parent=15 // pred_fallthru
          _
        // Predicated region
        $region25: #{tpu_custom_call.1} parent=15 // pred_check
          %p212 = pneg %p115
        $region26: #{tpu_custom_call.1} parent=15 // pred_check_branch
          %214 = sbr.rel (%p212) target = $region28
        $region27: #{tpu_custom_call.1} parent=15 // pred_region
          %s215 = sand.u32 %s23, 1
          %s216 = scalar_lea.sflag [#allocation9], %s215
          %s217 = sand.u32 %s105, 1
          %s218 = smul.addr %s217, 512
          %s219 = scalar_lea.vmem [#allocation10], %s218
          %s220 = sld [smem:[#allocation4 + %s30]]
          %s221 = smul.u32 32, %s31
          %s223 = ssub.s32 8192, 8192
          %224 = vsyncadd %s216, %s223
          %s225 = smul.addr %s221, 2
          %s226 = smul.addr %s220, 128
          %s227 = sadd.s32 %s225, %s226
          %s228 = smul.addr %s227, 128
          %s229 = scalar_lea.hbm %s3, %s228
          %s230 = sshll.u32 %s219, 4
          %s231 = int_to_ptr.vmem [resolvable:$true] %s230
          %236 = dma.hbm_to_vmem [thread:$0]  %s229, 8192, %s231, %s216, 256, 256, 16
        $region28: #{tpu_custom_call.1} parent=15 // pred_fallthru
          _
      $region16: #{tpu_custom_call.1} parent=5 // pred_fallthru
        _
      %p237 = scmp.le.s32.totalorder 1, %s23
      %p238 = scmp.lt.s32.totalorder %s23, 9
      %p239 = pnand %p237, %p238
      %p240 = pneg %p239
      // Predicated region
      $region29: #{tpu_custom_call.1} parent=5 // pred_check
        _
      $region30: #{tpu_custom_call.1} parent=5 // pred_check_branch
        %242 = sbr.rel (%p239) target = $region32
      $region31: #{tpu_custom_call.1} parent=5 // pred_region
        %s243 = ssub.s32 %s23, 1
        %s244 = sand.u32 %s48, 1
        %s245 = scalar_lea.sflag [#allocation6], %s244
        %s246 = sand.u32 %s48, 1
        %s247 = smul.addr %s246, 256
        %s248 = scalar_lea.vmem [#allocation5], %s247
        // Predicated region
        $region33: #{tpu_custom_call.1} parent=31 // pred_check
          %p249 = pneg %p61
        $region34: #{tpu_custom_call.1} parent=31 // pred_check_branch
          %251 = sbr.rel (%p249) target = $region36
        $region35: #{tpu_custom_call.1} parent=31 // pred_region
          %252 = dma.done %s245, 4096
        $region36: #{tpu_custom_call.1} parent=31 // pred_fallthru
          _
        %s253 = sand.u32 %s28, 1
        %s254 = scalar_lea.sflag [#allocation9], %s253
        %s255 = sand.u32 %s78, 1
        %s256 = smul.addr %s255, 1024
        %s257 = scalar_lea.vmem [#allocation8], %s256
        // Predicated region
        $region37: #{tpu_custom_call.1} parent=31 // pred_check
          %p258 = pneg %p91
        $region38: #{tpu_custom_call.1} parent=31 // pred_check_branch
          %260 = sbr.rel (%p258) target = $region40
        $region39: #{tpu_custom_call.1} parent=31 // pred_region
          %261 = dma.done %s254, 16384
        $region40: #{tpu_custom_call.1} parent=31 // pred_fallthru
          _
        %s262 = sand.u32 %s28, 1
        %s263 = scalar_lea.sflag [#allocation9], %s262
        %s264 = sand.u32 %s108, 1
        %s265 = smul.addr %s264, 512
        %s266 = scalar_lea.vmem [#allocation10], %s265
        // Predicated region
        $region41: #{tpu_custom_call.1} parent=31 // pred_check
          %p267 = pneg %p121
        $region42: #{tpu_custom_call.1} parent=31 // pred_check_branch
          %269 = sbr.rel (%p267) target = $region44
        $region43: #{tpu_custom_call.1} parent=31 // pred_region
          %270 = dma.done %s263, 8192
        $region44: #{tpu_custom_call.1} parent=31 // pred_fallthru
          _
        %s271 = sand.u32 %s48, 1
        %s272 = scalar_lea.sflag [#allocation6], %s271
        %s273 = sand.u32 %s48, 1
        %s274 = smul.addr %s273, 256
        %s275 = scalar_lea.vmem [#allocation5], %s274
        %p276 = pneg %p61
        %p277 = pneg %p58
        %s278 = sand.u32 %s28, 1
        %s279 = scalar_lea.sflag [#allocation9], %s278
        %s280 = sand.u32 %s78, 1
        %s281 = smul.addr %s280, 1024
        %s282 = scalar_lea.vmem [#allocation8], %s281
        %p283 = pneg %p91
        %p284 = pneg %p88
        %s285 = sand.u32 %s28, 1
        %s286 = scalar_lea.sflag [#allocation9], %s285
        %s287 = sand.u32 %s108, 1
        %s288 = smul.addr %s287, 512
        %s289 = scalar_lea.vmem [#allocation10], %s288
        %p290 = pneg %p121
        %p291 = pneg %p118
        %p292 = pneg %p147
        %p293 = pneg %p144
        %s294 = sand.u32 %s134, 1
        %s295 = scalar_lea.sflag [#allocation7], %s294
        %s296 = sand.u32 %s134, 1
        %s297 = smul.addr %s296, 256
        %s298 = scalar_lea.vmem [#allocation11], %s297
        %s299 = smul.u32 16, %s32
        %s300 = sld [smem:[#allocation4 + %s32]]
        %s301 = smul.u32 4, %s33
        %s302 = sld [smem:[#allocation4 + %s32]]
        %s303 = smul.u32 32, %s33
        %s304 = smul.u32 16, %s32
        %p305 = scmp.eq.s32.totalorder %s33, 0
        // Predicated region
        $region45: #{tpu_custom_call.1} parent=31 // pred_check
          %p306 = pneg %p305
        $region46: #{tpu_custom_call.1} parent=31 // pred_check_branch
          %308 = sbr.rel (%p306) target = $region48
        $region47: #{tpu_custom_call.1} parent=31 // pred_region
          %309 = vst [vmem:[#allocation2] sm:$0xff] 0.0
          %310 = vst [vmem:[#allocation2 + $0x8] sm:$0xff] 0.0
          %311 = vst [vmem:[#allocation2 + $0x10] sm:$0xff] 0.0
          %312 = vst [vmem:[#allocation2 + $0x18] sm:$0xff] 0.0
          %313 = vst [vmem:[#allocation2 + $0x20] sm:$0xff] 0.0
          %314 = vst [vmem:[#allocation2 + $0x28] sm:$0xff] 0.0
          %315 = vst [vmem:[#allocation2 + $0x30] sm:$0xff] 0.0
          %316 = vst [vmem:[#allocation2 + $0x38] sm:$0xff] 0.0
          %317 = vst [vmem:[#allocation2 + $0x40] sm:$0xff] 0.0
          %318 = vst [vmem:[#allocation2 + $0x48] sm:$0xff] 0.0
          %319 = vst [vmem:[#allocation2 + $0x50] sm:$0xff] 0.0
          %320 = vst [vmem:[#allocation2 + $0x58] sm:$0xff] 0.0
          %321 = vst [vmem:[#allocation2 + $0x60] sm:$0xff] 0.0
          %322 = vst [vmem:[#allocation2 + $0x68] sm:$0xff] 0.0
          %323 = vst [vmem:[#allocation2 + $0x70] sm:$0xff] 0.0
          %324 = vst [vmem:[#allocation2 + $0x78] sm:$0xff] 0.0
          %325 = vst [vmem:[#allocation2 + $0x80] sm:$0xff] 0.0
          %326 = vst [vmem:[#allocation2 + $0x88] sm:$0xff] 0.0
          %327 = vst [vmem:[#allocation2 + $0x90] sm:$0xff] 0.0
          %328 = vst [vmem:[#allocation2 + $0x98] sm:$0xff] 0.0
          %329 = vst [vmem:[#allocation2 + $0xa0] sm:$0xff] 0.0
          %330 = vst [vmem:[#allocation2 + $0xa8] sm:$0xff] 0.0
          %331 = vst [vmem:[#allocation2 + $0xb0] sm:$0xff] 0.0
          %332 = vst [vmem:[#allocation2 + $0xb8] sm:$0xff] 0.0
          %333 = vst [vmem:[#allocation2 + $0xc0] sm:$0xff] 0.0
          %334 = vst [vmem:[#allocation2 + $0xc8] sm:$0xff] 0.0
          %335 = vst [vmem:[#allocation2 + $0xd0] sm:$0xff] 0.0
          %336 = vst [vmem:[#allocation2 + $0xd8] sm:$0xff] 0.0
          %337 = vst [vmem:[#allocation2 + $0xe0] sm:$0xff] 0.0
          %338 = vst [vmem:[#allocation2 + $0xe8] sm:$0xff] 0.0
          %339 = vst [vmem:[#allocation2 + $0xf0] sm:$0xff] 0.0
          %340 = vst [vmem:[#allocation2 + $0xf8] sm:$0xff] 0.0
        $region48: #{tpu_custom_call.1} parent=31 // pred_fallthru
          _
        %v341 = vld [vmem:[%s248] sm:$0xff]
        %v342 = vld [vmem:[%s248 + $0x8] sm:$0xff]
        %v343 = vld [vmem:[%s248 + $0x10] sm:$0xff]
        %v344 = vld [vmem:[%s248 + $0x18] sm:$0xff]
        %v345 = vld [vmem:[%s248 + $0x20] sm:$0xff]
        %v346 = vld [vmem:[%s248 + $0x28] sm:$0xff]
        %v347 = vld [vmem:[%s248 + $0x30] sm:$0xff]
        %v348 = vld [vmem:[%s248 + $0x38] sm:$0xff]
        %v349 = vld [vmem:[%s248 + $0x40] sm:$0xff]
        %v350 = vld [vmem:[%s248 + $0x48] sm:$0xff]
        %v351 = vld [vmem:[%s248 + $0x50] sm:$0xff]
        %v352 = vld [vmem:[%s248 + $0x58] sm:$0xff]
        %v353 = vld [vmem:[%s248 + $0x60] sm:$0xff]
        %v354 = vld [vmem:[%s248 + $0x68] sm:$0xff]
        %v355 = vld [vmem:[%s248 + $0x70] sm:$0xff]
        %v356 = vld [vmem:[%s248 + $0x78] sm:$0xff]
        %v357 = vld [vmem:[%s248 + $0x80] sm:$0xff]
        %v358 = vld [vmem:[%s248 + $0x88] sm:$0xff]
        %v359 = vld [vmem:[%s248 + $0x90] sm:$0xff]
        %v360 = vld [vmem:[%s248 + $0x98] sm:$0xff]
        %v361 = vld [vmem:[%s248 + $0xa0] sm:$0xff]
        %v362 = vld [vmem:[%s248 + $0xa8] sm:$0xff]
        %v363 = vld [vmem:[%s248 + $0xb0] sm:$0xff]
        %v364 = vld [vmem:[%s248 + $0xb8] sm:$0xff]
        %v365 = vld [vmem:[%s248 + $0xc0] sm:$0xff]
        %v366 = vld [vmem:[%s248 + $0xc8] sm:$0xff]
        %v367 = vld [vmem:[%s248 + $0xd0] sm:$0xff]
        %v368 = vld [vmem:[%s248 + $0xd8] sm:$0xff]
        %v369 = vld [vmem:[%s248 + $0xe0] sm:$0xff]
        %v370 = vld [vmem:[%s248 + $0xe8] sm:$0xff]
        %v371 = vld [vmem:[%s248 + $0xf0] sm:$0xff]
        %v372 = vld [vmem:[%s248 + $0xf8] sm:$0xff]
        %v373 = vld [vmem:[%s257] sm:$0xff]
        %v374 = vld [vmem:[%s257 + $0x8] sm:$0xff]
        %v375 = vld [vmem:[%s257 + $0x10] sm:$0xff]
        %v376 = vld [vmem:[%s257 + $0x18] sm:$0xff]
        %v377 = vld [vmem:[%s257 + $0x20] sm:$0xff]
        %v378 = vld [vmem:[%s257 + $0x28] sm:$0xff]
        %v379 = vld [vmem:[%s257 + $0x30] sm:$0xff]
        %v380 = vld [vmem:[%s257 + $0x38] sm:$0xff]
        %v381 = vld [vmem:[%s257 + $0x40] sm:$0xff]
        %v382 = vld [vmem:[%s257 + $0x48] sm:$0xff]
        %v383 = vld [vmem:[%s257 + $0x50] sm:$0xff]
        %v384 = vld [vmem:[%s257 + $0x58] sm:$0xff]
        %v385 = vld [vmem:[%s257 + $0x60] sm:$0xff]
        %v386 = vld [vmem:[%s257 + $0x68] sm:$0xff]
        %v387 = vld [vmem:[%s257 + $0x70] sm:$0xff]
        %v388 = vld [vmem:[%s257 + $0x78] sm:$0xff]
        %v389 = vld [vmem:[%s257 + $0x80] sm:$0xff]
        %v390 = vld [vmem:[%s257 + $0x88] sm:$0xff]
        %v391 = vld [vmem:[%s257 + $0x90] sm:$0xff]
        %v392 = vld [vmem:[%s257 + $0x98] sm:$0xff]
        %v393 = vld [vmem:[%s257 + $0xa0] sm:$0xff]
        %v394 = vld [vmem:[%s257 + $0xa8] sm:$0xff]
        %v395 = vld [vmem:[%s257 + $0xb0] sm:$0xff]
        %v396 = vld [vmem:[%s257 + $0xb8] sm:$0xff]
        %v397 = vld [vmem:[%s257 + $0xc0] sm:$0xff]
        %v398 = vld [vmem:[%s257 + $0xc8] sm:$0xff]
        %v399 = vld [vmem:[%s257 + $0xd0] sm:$0xff]
        %v400 = vld [vmem:[%s257 + $0xd8] sm:$0xff]
        %v401 = vld [vmem:[%s257 + $0xe0] sm:$0xff]
        %v402 = vld [vmem:[%s257 + $0xe8] sm:$0xff]
        %v403 = vld [vmem:[%s257 + $0xf0] sm:$0xff]
        %v404 = vld [vmem:[%s257 + $0xf8] sm:$0xff]
        %v405 = vld [vmem:[%s257 + $0x100] sm:$0xff]
        %v406 = vld [vmem:[%s257 + $0x108] sm:$0xff]
        %v407 = vld [vmem:[%s257 + $0x110] sm:$0xff]
        %v408 = vld [vmem:[%s257 + $0x118] sm:$0xff]
        %v409 = vld [vmem:[%s257 + $0x120] sm:$0xff]
        %v410 = vld [vmem:[%s257 + $0x128] sm:$0xff]
        %v411 = vld [vmem:[%s257 + $0x130] sm:$0xff]
        %v412 = vld [vmem:[%s257 + $0x138] sm:$0xff]
        %v413 = vld [vmem:[%s257 + $0x140] sm:$0xff]
        %v414 = vld [vmem:[%s257 + $0x148] sm:$0xff]
        %v415 = vld [vmem:[%s257 + $0x150] sm:$0xff]
        %v416 = vld [vmem:[%s257 + $0x158] sm:$0xff]
        %v417 = vld [vmem:[%s257 + $0x160] sm:$0xff]
        %v418 = vld [vmem:[%s257 + $0x168] sm:$0xff]
        %v419 = vld [vmem:[%s257 + $0x170] sm:$0xff]
        %v420 = vld [vmem:[%s257 + $0x178] sm:$0xff]
        %v421 = vld [vmem:[%s257 + $0x180] sm:$0xff]
        %v422 = vld [vmem:[%s257 + $0x188] sm:$0xff]
        %v423 = vld [vmem:[%s257 + $0x190] sm:$0xff]
        %v424 = vld [vmem:[%s257 + $0x198] sm:$0xff]
        %v425 = vld [vmem:[%s257 + $0x1a0] sm:$0xff]
        %v426 = vld [vmem:[%s257 + $0x1a8] sm:$0xff]
        %v427 = vld [vmem:[%s257 + $0x1b0] sm:$0xff]
        %v428 = vld [vmem:[%s257 + $0x1b8] sm:$0xff]
        %v429 = vld [vmem:[%s257 + $0x1c0] sm:$0xff]
        %v430 = vld [vmem:[%s257 + $0x1c8] sm:$0xff]
        %v431 = vld [vmem:[%s257 + $0x1d0] sm:$0xff]
        %v432 = vld [vmem:[%s257 + $0x1d8] sm:$0xff]
        %v433 = vld [vmem:[%s257 + $0x1e0] sm:$0xff]
        %v434 = vld [vmem:[%s257 + $0x1e8] sm:$0xff]
        %v435 = vld [vmem:[%s257 + $0x1f0] sm:$0xff]
        %v436 = vld [vmem:[%s257 + $0x1f8] sm:$0xff]
        %v437 = vld [vmem:[%s257 + $0x200] sm:$0xff]
        %v438 = vld [vmem:[%s257 + $0x208] sm:$0xff]
        %v439 = vld [vmem:[%s257 + $0x210] sm:$0xff]
        %v440 = vld [vmem:[%s257 + $0x218] sm:$0xff]
        %v441 = vld [vmem:[%s257 + $0x220] sm:$0xff]
        %v442 = vld [vmem:[%s257 + $0x228] sm:$0xff]
        %v443 = vld [vmem:[%s257 + $0x230] sm:$0xff]
        %v444 = vld [vmem:[%s257 + $0x238] sm:$0xff]
        %v445 = vld [vmem:[%s257 + $0x240] sm:$0xff]
        %v446 = vld [vmem:[%s257 + $0x248] sm:$0xff]
        %v447 = vld [vmem:[%s257 + $0x250] sm:$0xff]
        %v448 = vld [vmem:[%s257 + $0x258] sm:$0xff]
        %v449 = vld [vmem:[%s257 + $0x260] sm:$0xff]
        %v450 = vld [vmem:[%s257 + $0x268] sm:$0xff]
        %v451 = vld [vmem:[%s257 + $0x270] sm:$0xff]
        %v452 = vld [vmem:[%s257 + $0x278] sm:$0xff]
        %v453 = vld [vmem:[%s257 + $0x280] sm:$0xff]
        %v454 = vld [vmem:[%s257 + $0x288] sm:$0xff]
        %v455 = vld [vmem:[%s257 + $0x290] sm:$0xff]
        %v456 = vld [vmem:[%s257 + $0x298] sm:$0xff]
        %v457 = vld [vmem:[%s257 + $0x2a0] sm:$0xff]
        %v458 = vld [vmem:[%s257 + $0x2a8] sm:$0xff]
        %v459 = vld [vmem:[%s257 + $0x2b0] sm:$0xff]
        %v460 = vld [vmem:[%s257 + $0x2b8] sm:$0xff]
        %v461 = vld [vmem:[%s257 + $0x2c0] sm:$0xff]
        %v462 = vld [vmem:[%s257 + $0x2c8] sm:$0xff]
        %v463 = vld [vmem:[%s257 + $0x2d0] sm:$0xff]
        %v464 = vld [vmem:[%s257 + $0x2d8] sm:$0xff]
        %v465 = vld [vmem:[%s257 + $0x2e0] sm:$0xff]
        %v466 = vld [vmem:[%s257 + $0x2e8] sm:$0xff]
        %v467 = vld [vmem:[%s257 + $0x2f0] sm:$0xff]
        %v468 = vld [vmem:[%s257 + $0x2f8] sm:$0xff]
        %v469 = vld [vmem:[%s257 + $0x300] sm:$0xff]
        %v470 = vld [vmem:[%s257 + $0x308] sm:$0xff]
        %v471 = vld [vmem:[%s257 + $0x310] sm:$0xff]
        %v472 = vld [vmem:[%s257 + $0x318] sm:$0xff]
        %v473 = vld [vmem:[%s257 + $0x320] sm:$0xff]
        %v474 = vld [vmem:[%s257 + $0x328] sm:$0xff]
        %v475 = vld [vmem:[%s257 + $0x330] sm:$0xff]
        %v476 = vld [vmem:[%s257 + $0x338] sm:$0xff]
        %v477 = vld [vmem:[%s257 + $0x340] sm:$0xff]
        %v478 = vld [vmem:[%s257 + $0x348] sm:$0xff]
        %v479 = vld [vmem:[%s257 + $0x350] sm:$0xff]
        %v480 = vld [vmem:[%s257 + $0x358] sm:$0xff]
        %v481 = vld [vmem:[%s257 + $0x360] sm:$0xff]
        %v482 = vld [vmem:[%s257 + $0x368] sm:$0xff]
        %v483 = vld [vmem:[%s257 + $0x370] sm:$0xff]
        %v484 = vld [vmem:[%s257 + $0x378] sm:$0xff]
        %v485 = vld [vmem:[%s257 + $0x380] sm:$0xff]
        %v486 = vld [vmem:[%s257 + $0x388] sm:$0xff]
        %v487 = vld [vmem:[%s257 + $0x390] sm:$0xff]
        %v488 = vld [vmem:[%s257 + $0x398] sm:$0xff]
        %v489 = vld [vmem:[%s257 + $0x3a0] sm:$0xff]
        %v490 = vld [vmem:[%s257 + $0x3a8] sm:$0xff]
        %v491 = vld [vmem:[%s257 + $0x3b0] sm:$0xff]
        %v492 = vld [vmem:[%s257 + $0x3b8] sm:$0xff]
        %v493 = vld [vmem:[%s257 + $0x3c0] sm:$0xff]
        %v494 = vld [vmem:[%s257 + $0x3c8] sm:$0xff]
        %v495 = vld [vmem:[%s257 + $0x3d0] sm:$0xff]
        %v496 = vld [vmem:[%s257 + $0x3d8] sm:$0xff]
        %v497 = vld [vmem:[%s257 + $0x3e0] sm:$0xff]
        %v498 = vld [vmem:[%s257 + $0x3e8] sm:$0xff]
        %v499 = vld [vmem:[%s257 + $0x3f0] sm:$0xff]
        %v500 = vld [vmem:[%s257 + $0x3f8] sm:$0xff]
        %501 = vmatprep.subr.mxu0 %v434
        %502 = vmatpush1.msra.mxu0 %v433
        %503 = vmatprep.subr.mxu0 %v430
        %504 = vmatpush1.msra.mxu0 %v429
        %505 = vmatprep.subr.mxu0 %v426
        %506 = vmatpush1.msra.mxu0 %v425
        %507 = vmatprep.subr.mxu0 %v422
        %508 = vmatpush1.msra.mxu0 %v421
        %509 = vmatprep.subr.mxu0 %v418
        %510 = vmatpush1.msra.mxu0 %v417
        %511 = vmatprep.subr.mxu0 %v414
        %512 = vmatpush1.msra.mxu0 %v413
        %513 = vmatprep.subr.mxu0 %v410
        %514 = vmatpush1.msra.mxu0 %v409
        %515 = vmatprep.subr.mxu0 %v406
        %516 = vmatpush1.msra.mxu0 %v405
        %517 = vmatprep.subr.mxu0 %v402
        %518 = vmatpush1.msra.mxu0 %v401
        %519 = vmatprep.subr.mxu0 %v398
        %520 = vmatpush1.msra.mxu0 %v397
        %521 = vmatprep.subr.mxu0 %v394
        %522 = vmatpush1.msra.mxu0 %v393
        %523 = vmatprep.subr.mxu0 %v390
        %524 = vmatpush1.msra.mxu0 %v389
        %525 = vmatprep.subr.mxu0 %v386
        %526 = vmatpush1.msra.mxu0 %v385
        %527 = vmatprep.subr.mxu0 %v382
        %528 = vmatpush1.msra.mxu0 %v381
        %529 = vmatprep.subr.mxu0 %v378
        %530 = vmatpush1.msra.mxu0 %v377
        %531 = vmatprep.subr.mxu0 %v374
        %532 = vmatpush1.msra.mxu0 %v373
        %533 = vmatprep.subr.mxu0 %v498
        %534 = vmatpush2.msra.mxu0 %v497
        %535 = vmatprep.subr.mxu0 %v494
        %536 = vmatpush2.msra.mxu0 %v493
        %537 = vmatprep.subr.mxu0 %v490
        %538 = vmatpush2.msra.mxu0 %v489
        %539 = vmatprep.subr.mxu0 %v486
        %540 = vmatpush2.msra.mxu0 %v485
        %541 = vmatprep.subr.mxu0 %v482
        %542 = vmatpush2.msra.mxu0 %v481
        %543 = vmatprep.subr.mxu0 %v478
        %544 = vmatpush2.msra.mxu0 %v477
        %545 = vmatprep.subr.mxu0 %v474
        %546 = vmatpush2.msra.mxu0 %v473
        %547 = vmatprep.subr.mxu0 %v470
        %548 = vmatpush2.msra.mxu0 %v469
        %549 = vmatprep.subr.mxu0 %v466
        %550 = vmatpush2.msra.mxu0 %v465
        %551 = vmatprep.subr.mxu0 %v462
        %552 = vmatpush2.msra.mxu0 %v461
        %553 = vmatprep.subr.mxu0 %v458
        %554 = vmatpush2.msra.mxu0 %v457
        %555 = vmatprep.subr.mxu0 %v454
        %556 = vmatpush2.msra.mxu0 %v453
        %557 = vmatprep.subr.mxu0 %v450
        %558 = vmatpush2.msra.mxu0 %v449
        %559 = vmatprep.subr.mxu0 %v446
        %560 = vmatpush2.msra.mxu0 %v445
        %561 = vmatprep.subr.mxu0 %v442
        %562 = vmatpush2.msra.mxu0 %v441
        %563 = vmatprep.subr.mxu0 %v438
        %564 = vmatpush2.msra.mxu0 %v437
        %565 = vmatprep.mubr.f32.mxu0 %v342
        %566 = vmatmul.mubr.f32.gmra.mxu0 %v341
        %v567 = vpop.f32.mrf.mxu0
        %v568 = vadd.f32 0.0, %v567
        %v569 = vpop.f32.mrf.mxu0
        %v570 = vadd.f32 0.0, %v569
        %571 = vmatprep.mubr.f32.mxu0 %v344
        %572 = vmatmul.mubr.f32.gmra.mxu0 %v343
        %v573 = vpop.f32.mrf.mxu0
        %v574 = vadd.f32 0.0, %v573
        %v575 = vpop.f32.mrf.mxu0
        %v576 = vadd.f32 0.0, %v575
        %577 = vmatprep.mubr.f32.mxu0 %v346
        %578 = vmatmul.mubr.f32.gmra.mxu0 %v345
        %v579 = vpop.f32.mrf.mxu0
        %v580 = vadd.f32 0.0, %v579
        %v581 = vpop.f32.mrf.mxu0
        %v582 = vadd.f32 0.0, %v581
        %583 = vmatprep.mubr.f32.mxu0 %v348
        %584 = vmatmul.mubr.f32.gmra.mxu0 %v347
        %v585 = vpop.f32.mrf.mxu0
        %v586 = vadd.f32 0.0, %v585
        %v587 = vpop.f32.mrf.mxu0
        %v588 = vadd.f32 0.0, %v587
        %589 = vmatprep.mubr.f32.mxu0 %v350
        %590 = vmatmul.mubr.f32.gmra.mxu0 %v349
        %v591 = vpop.f32.mrf.mxu0
        %v592 = vadd.f32 0.0, %v591
        %v593 = vpop.f32.mrf.mxu0
        %v594 = vadd.f32 0.0, %v593
        %595 = vmatprep.mubr.f32.mxu0 %v352
        %596 = vmatmul.mubr.f32.gmra.mxu0 %v351
        %v597 = vpop.f32.mrf.mxu0
        %v598 = vadd.f32 0.0, %v597
        %v599 = vpop.f32.mrf.mxu0
        %v600 = vadd.f32 0.0, %v599
        %601 = vmatprep.mubr.f32.mxu0 %v354
        %602 = vmatmul.mubr.f32.gmra.mxu0 %v353
        %v603 = vpop.f32.mrf.mxu0
        %v604 = vadd.f32 0.0, %v603
        %v605 = vpop.f32.mrf.mxu0
        %v606 = vadd.f32 0.0, %v605
        %607 = vmatprep.mubr.f32.mxu0 %v356
        %608 = vmatmul.mubr.f32.gmra.mxu0 %v355
        %v609 = vpop.f32.mrf.mxu0
        %v610 = vadd.f32 0.0, %v609
        %v611 = vpop.f32.mrf.mxu0
        %v612 = vadd.f32 0.0, %v611
        %613 = vmatprep.mubr.f32.mxu0 %v358
        %614 = vmatmul.mubr.f32.gmra.mxu0 %v357
        %v615 = vpop.f32.mrf.mxu0
        %v616 = vadd.f32 0.0, %v615
        %v617 = vpop.f32.mrf.mxu0
        %v618 = vadd.f32 0.0, %v617
        %619 = vmatprep.mubr.f32.mxu0 %v360
        %620 = vmatmul.mubr.f32.gmra.mxu0 %v359
        %v621 = vpop.f32.mrf.mxu0
        %v622 = vadd.f32 0.0, %v621
        %v623 = vpop.f32.mrf.mxu0
        %v624 = vadd.f32 0.0, %v623
        %625 = vmatprep.mubr.f32.mxu0 %v362
        %626 = vmatmul.mubr.f32.gmra.mxu0 %v361
        %v627 = vpop.f32.mrf.mxu0
        %v628 = vadd.f32 0.0, %v627
        %v629 = vpop.f32.mrf.mxu0
        %v630 = vadd.f32 0.0, %v629
        %631 = vmatprep.mubr.f32.mxu0 %v364
        %632 = vmatmul.mubr.f32.gmra.mxu0 %v363
        %v633 = vpop.f32.mrf.mxu0
        %v634 = vadd.f32 0.0, %v633
        %v635 = vpop.f32.mrf.mxu0
        %v636 = vadd.f32 0.0, %v635
        %637 = vmatprep.mubr.f32.mxu0 %v366
        %638 = vmatmul.mubr.f32.gmra.mxu0 %v365
        %v639 = vpop.f32.mrf.mxu0
        %v640 = vadd.f32 0.0, %v639
        %v641 = vpop.f32.mrf.mxu0
        %v642 = vadd.f32 0.0, %v641
        %643 = vmatprep.mubr.f32.mxu0 %v368
        %644 = vmatmul.mubr.f32.gmra.mxu0 %v367
        %v645 = vpop.f32.mrf.mxu0
        %v646 = vadd.f32 0.0, %v645
        %v647 = vpop.f32.mrf.mxu0
        %v648 = vadd.f32 0.0, %v647
        %649 = vmatprep.mubr.f32.mxu0 %v370
        %650 = vmatmul.mubr.f32.gmra.mxu0 %v369
        %v651 = vpop.f32.mrf.mxu0
        %v652 = vadd.f32 0.0, %v651
        %v653 = vpop.f32.mrf.mxu0
        %v654 = vadd.f32 0.0, %v653
        %655 = vmatprep.mubr.f32.mxu0 %v372
        %656 = vmatmul.mubr.f32.gmra.mxu0 %v371
        %v657 = vpop.f32.mrf.mxu0
        %v658 = vadd.f32 0.0, %v657
        %v659 = vpop.f32.mrf.mxu0
        %v660 = vadd.f32 0.0, %v659
        %661 = vdwg.mxu0
        %662 = vmatprep.subr.mxu0 %v436
        %663 = vmatpush1.msra.mxu0 %v435
        %664 = vmatprep.subr.mxu0 %v432
        %665 = vmatpush1.msra.mxu0 %v431
        %666 = vmatprep.subr.mxu0 %v428
        %667 = vmatpush1.msra.mxu0 %v427
        %668 = vmatprep.subr.mxu0 %v424
        %669 = vmatpush1.msra.mxu0 %v423
        %670 = vmatprep.subr.mxu0 %v420
        %671 = vmatpush1.msra.mxu0 %v419
        %672 = vmatprep.subr.mxu0 %v416
        %673 = vmatpush1.msra.mxu0 %v415
        %674 = vmatprep.subr.mxu0 %v412
        %675 = vmatpush1.msra.mxu0 %v411
        %676 = vmatprep.subr.mxu0 %v408
        %677 = vmatpush1.msra.mxu0 %v407
        %678 = vmatprep.subr.mxu0 %v404
        %679 = vmatpush1.msra.mxu0 %v403
        %680 = vmatprep.subr.mxu0 %v400
        %681 = vmatpush1.msra.mxu0 %v399
        %682 = vmatprep.subr.mxu0 %v396
        %683 = vmatpush1.msra.mxu0 %v395
        %684 = vmatprep.subr.mxu0 %v392
        %685 = vmatpush1.msra.mxu0 %v391
        %686 = vmatprep.subr.mxu0 %v388
        %687 = vmatpush1.msra.mxu0 %v387
        %688 = vmatprep.subr.mxu0 %v384
        %689 = vmatpush1.msra.mxu0 %v383
        %690 = vmatprep.subr.mxu0 %v380
        %691 = vmatpush1.msra.mxu0 %v379
        %692 = vmatprep.subr.mxu0 %v376
        %693 = vmatpush1.msra.mxu0 %v375
        %694 = vmatprep.subr.mxu0 %v500
        %695 = vmatpush2.msra.mxu0 %v499
        %696 = vmatprep.subr.mxu0 %v496
        %697 = vmatpush2.msra.mxu0 %v495
        %698 = vmatprep.subr.mxu0 %v492
        %699 = vmatpush2.msra.mxu0 %v491
        %700 = vmatprep.subr.mxu0 %v488
        %701 = vmatpush2.msra.mxu0 %v487
        %702 = vmatprep.subr.mxu0 %v484
        %703 = vmatpush2.msra.mxu0 %v483
        %704 = vmatprep.subr.mxu0 %v480
        %705 = vmatpush2.msra.mxu0 %v479
        %706 = vmatprep.subr.mxu0 %v476
        %707 = vmatpush2.msra.mxu0 %v475
        %708 = vmatprep.subr.mxu0 %v472
        %709 = vmatpush2.msra.mxu0 %v471
        %710 = vmatprep.subr.mxu0 %v468
        %711 = vmatpush2.msra.mxu0 %v467
        %712 = vmatprep.subr.mxu0 %v464
        %713 = vmatpush2.msra.mxu0 %v463
        %714 = vmatprep.subr.mxu0 %v460
        %715 = vmatpush2.msra.mxu0 %v459
        %716 = vmatprep.subr.mxu0 %v456
        %717 = vmatpush2.msra.mxu0 %v455
        %718 = vmatprep.subr.mxu0 %v452
        %719 = vmatpush2.msra.mxu0 %v451
        %720 = vmatprep.subr.mxu0 %v448
        %721 = vmatpush2.msra.mxu0 %v447
        %722 = vmatprep.subr.mxu0 %v444
        %723 = vmatpush2.msra.mxu0 %v443
        %724 = vmatprep.subr.mxu0 %v440
        %725 = vmatpush2.msra.mxu0 %v439
        %726 = vmatprep.mubr.f32.mxu0 %v342
        %727 = vmatmul.mubr.f32.gmra.mxu0 %v341
        %v728 = vpop.f32.mrf.mxu0
        %v729 = vadd.f32 0.0, %v728
        %v730 = vpop.f32.mrf.mxu0
        %v731 = vadd.f32 0.0, %v730
        %732 = vmatprep.mubr.f32.mxu0 %v344
        %733 = vmatmul.mubr.f32.gmra.mxu0 %v343
        %v734 = vpop.f32.mrf.mxu0
        %v735 = vadd.f32 0.0, %v734
        %v736 = vpop.f32.mrf.mxu0
        %v737 = vadd.f32 0.0, %v736
        %738 = vmatprep.mubr.f32.mxu0 %v346
        %739 = vmatmul.mubr.f32.gmra.mxu0 %v345
        %v740 = vpop.f32.mrf.mxu0
        %v741 = vadd.f32 0.0, %v740
        %v742 = vpop.f32.mrf.mxu0
        %v743 = vadd.f32 0.0, %v742
        %744 = vmatprep.mubr.f32.mxu0 %v348
        %745 = vmatmul.mubr.f32.gmra.mxu0 %v347
        %v746 = vpop.f32.mrf.mxu0
        %v747 = vadd.f32 0.0, %v746
        %v748 = vpop.f32.mrf.mxu0
        %v749 = vadd.f32 0.0, %v748
        %750 = vmatprep.mubr.f32.mxu0 %v350
        %751 = vmatmul.mubr.f32.gmra.mxu0 %v349
        %v752 = vpop.f32.mrf.mxu0
        %v753 = vadd.f32 0.0, %v752
        %v754 = vpop.f32.mrf.mxu0
        %v755 = vadd.f32 0.0, %v754
        %756 = vmatprep.mubr.f32.mxu0 %v352
        %757 = vmatmul.mubr.f32.gmra.mxu0 %v351
        %v758 = vpop.f32.mrf.mxu0
        %v759 = vadd.f32 0.0, %v758
        %v760 = vpop.f32.mrf.mxu0
        %v761 = vadd.f32 0.0, %v760
        %762 = vmatprep.mubr.f32.mxu0 %v354
        %763 = vmatmul.mubr.f32.gmra.mxu0 %v353
        %v764 = vpop.f32.mrf.mxu0
        %v765 = vadd.f32 0.0, %v764
        %v766 = vpop.f32.mrf.mxu0
        %v767 = vadd.f32 0.0, %v766
        %768 = vmatprep.mubr.f32.mxu0 %v356
        %769 = vmatmul.mubr.f32.gmra.mxu0 %v355
        %v770 = vpop.f32.mrf.mxu0
        %v771 = vadd.f32 0.0, %v770
        %v772 = vpop.f32.mrf.mxu0
        %v773 = vadd.f32 0.0, %v772
        %774 = vmatprep.mubr.f32.mxu0 %v358
        %775 = vmatmul.mubr.f32.gmra.mxu0 %v357
        %v776 = vpop.f32.mrf.mxu0
        %v777 = vadd.f32 0.0, %v776
        %v778 = vpop.f32.mrf.mxu0
        %v779 = vadd.f32 0.0, %v778
        %780 = vmatprep.mubr.f32.mxu0 %v360
        %781 = vmatmul.mubr.f32.gmra.mxu0 %v359
        %v782 = vpop.f32.mrf.mxu0
        %v783 = vadd.f32 0.0, %v782
        %v784 = vpop.f32.mrf.mxu0
        %v785 = vadd.f32 0.0, %v784
        %786 = vmatprep.mubr.f32.mxu0 %v362
        %787 = vmatmul.mubr.f32.gmra.mxu0 %v361
        %v788 = vpop.f32.mrf.mxu0
        %v789 = vadd.f32 0.0, %v788
        %v790 = vpop.f32.mrf.mxu0
        %v791 = vadd.f32 0.0, %v790
        %792 = vmatprep.mubr.f32.mxu0 %v364
        %793 = vmatmul.mubr.f32.gmra.mxu0 %v363
        %v794 = vpop.f32.mrf.mxu0
        %v795 = vadd.f32 0.0, %v794
        %v796 = vpop.f32.mrf.mxu0
        %v797 = vadd.f32 0.0, %v796
        %798 = vmatprep.mubr.f32.mxu0 %v366
        %799 = vmatmul.mubr.f32.gmra.mxu0 %v365
        %v800 = vpop.f32.mrf.mxu0
        %v801 = vadd.f32 0.0, %v800
        %v802 = vpop.f32.mrf.mxu0
        %v803 = vadd.f32 0.0, %v802
        %804 = vmatprep.mubr.f32.mxu0 %v368
        %805 = vmatmul.mubr.f32.gmra.mxu0 %v367
        %v806 = vpop.f32.mrf.mxu0
        %v807 = vadd.f32 0.0, %v806
        %v808 = vpop.f32.mrf.mxu0
        %v809 = vadd.f32 0.0, %v808
        %810 = vmatprep.mubr.f32.mxu0 %v370
        %811 = vmatmul.mubr.f32.gmra.mxu0 %v369
        %v812 = vpop.f32.mrf.mxu0
        %v813 = vadd.f32 0.0, %v812
        %v814 = vpop.f32.mrf.mxu0
        %v815 = vadd.f32 0.0, %v814
        %816 = vmatprep.mubr.f32.mxu0 %v372
        %817 = vmatmul.mubr.f32.gmra.mxu0 %v371
        %v818 = vpop.f32.mrf.mxu0
        %v819 = vadd.f32 0.0, %v818
        %v820 = vpop.f32.mrf.mxu0
        %v821 = vadd.f32 0.0, %v820
        %822 = vdwg.mxu0
        %v823 = vxor.u32 %v568, 2147483648
        %v824 = vxor.u32 %v570, 2147483648
        %v825 = vxor.u32 %v574, 2147483648
        %v826 = vxor.u32 %v576, 2147483648
        %v827 = vxor.u32 %v580, 2147483648
        %v828 = vxor.u32 %v582, 2147483648
        %v829 = vxor.u32 %v586, 2147483648
        %v830 = vxor.u32 %v588, 2147483648
        %v831 = vxor.u32 %v592, 2147483648
        %v832 = vxor.u32 %v594, 2147483648
        %v833 = vxor.u32 %v598, 2147483648
        %v834 = vxor.u32 %v600, 2147483648
        %v835 = vxor.u32 %v604, 2147483648
        %v836 = vxor.u32 %v606, 2147483648
        %v837 = vxor.u32 %v610, 2147483648
        %v838 = vxor.u32 %v612, 2147483648
        %v839 = vxor.u32 %v616, 2147483648
        %v840 = vxor.u32 %v618, 2147483648
        %v841 = vxor.u32 %v622, 2147483648
        %v842 = vxor.u32 %v624, 2147483648
        %v843 = vxor.u32 %v628, 2147483648
        %v844 = vxor.u32 %v630, 2147483648
        %v845 = vxor.u32 %v634, 2147483648
        %v846 = vxor.u32 %v636, 2147483648
        %v847 = vxor.u32 %v640, 2147483648
        %v848 = vxor.u32 %v642, 2147483648
        %v849 = vxor.u32 %v646, 2147483648
        %v850 = vxor.u32 %v648, 2147483648
        %v851 = vxor.u32 %v652, 2147483648
        %v852 = vxor.u32 %v654, 2147483648
        %v853 = vxor.u32 %v658, 2147483648
        %v854 = vxor.u32 %v660, 2147483648
        %v855 = vmul.f32 %v823, 1.442695
        %v856 = vpow.pop %v855
        %v857 = vmul.f32 %v824, 1.442695
        %v858 = vpow.pop %v857
        %v859 = vmul.f32 %v825, 1.442695
        %v860 = vpow.pop %v859
        %v861 = vmul.f32 %v826, 1.442695
        %v862 = vpow.pop %v861
        %v863 = vmul.f32 %v827, 1.442695
        %v864 = vpow.pop %v863
        %v865 = vmul.f32 %v828, 1.442695
        %v866 = vpow.pop %v865
        %v867 = vmul.f32 %v829, 1.442695
        %v868 = vpow.pop %v867
        %v869 = vmul.f32 %v830, 1.442695
        %v870 = vpow.pop %v869
        %v871 = vmul.f32 %v831, 1.442695
        %v872 = vpow.pop %v871
        %v873 = vmul.f32 %v832, 1.442695
        %v874 = vpow.pop %v873
        %v875 = vmul.f32 %v833, 1.442695
        %v876 = vpow.pop %v875
        %v877 = vmul.f32 %v834, 1.442695
        %v878 = vpow.pop %v877
        %v879 = vmul.f32 %v835, 1.442695
        %v880 = vpow.pop %v879
        %v881 = vmul.f32 %v836, 1.442695
        %v882 = vpow.pop %v881
        %v883 = vmul.f32 %v837, 1.442695
        %v884 = vpow.pop %v883
        %v885 = vmul.f32 %v838, 1.442695
        %v886 = vpow.pop %v885
        %v887 = vmul.f32 %v839, 1.442695
        %v888 = vpow.pop %v887
        %v889 = vmul.f32 %v840, 1.442695
        %v890 = vpow.pop %v889
        %v891 = vmul.f32 %v841, 1.442695
        %v892 = vpow.pop %v891
        %v893 = vmul.f32 %v842, 1.442695
        %v894 = vpow.pop %v893
        %v895 = vmul.f32 %v843, 1.442695
        %v896 = vpow.pop %v895
        %v897 = vmul.f32 %v844, 1.442695
        %v898 = vpow.pop %v897
        %v899 = vmul.f32 %v845, 1.442695
        %v900 = vpow.pop %v899
        %v901 = vmul.f32 %v846, 1.442695
        %v902 = vpow.pop %v901
        %v903 = vmul.f32 %v847, 1.442695
        %v904 = vpow.pop %v903
        %v905 = vmul.f32 %v848, 1.442695
        %v906 = vpow.pop %v905
        %v907 = vmul.f32 %v849, 1.442695
        %v908 = vpow.pop %v907
        %v909 = vmul.f32 %v850, 1.442695
        %v910 = vpow.pop %v909
        %v911 = vmul.f32 %v851, 1.442695
        %v912 = vpow.pop %v911
        %v913 = vmul.f32 %v852, 1.442695
        %v914 = vpow.pop %v913
        %v915 = vmul.f32 %v853, 1.442695
        %v916 = vpow.pop %v915
        %v917 = vmul.f32 %v854, 1.442695
        %v918 = vpow.pop %v917
        %v919 = vadd.f32 %v856, 1.0
        %v920 = vadd.f32 %v858, 1.0
        %v921 = vadd.f32 %v860, 1.0
        %v922 = vadd.f32 %v862, 1.0
        %v923 = vadd.f32 %v864, 1.0
        %v924 = vadd.f32 %v866, 1.0
        %v925 = vadd.f32 %v868, 1.0
        %v926 = vadd.f32 %v870, 1.0
        %v927 = vadd.f32 %v872, 1.0
        %v928 = vadd.f32 %v874, 1.0
        %v929 = vadd.f32 %v876, 1.0
        %v930 = vadd.f32 %v878, 1.0
        %v931 = vadd.f32 %v880, 1.0
        %v932 = vadd.f32 %v882, 1.0
        %v933 = vadd.f32 %v884, 1.0
        %v934 = vadd.f32 %v886, 1.0
        %v935 = vadd.f32 %v888, 1.0
        %v936 = vadd.f32 %v890, 1.0
        %v937 = vadd.f32 %v892, 1.0
        %v938 = vadd.f32 %v894, 1.0
        %v939 = vadd.f32 %v896, 1.0
        %v940 = vadd.f32 %v898, 1.0
        %v941 = vadd.f32 %v900, 1.0
        %v942 = vadd.f32 %v902, 1.0
        %v943 = vadd.f32 %v904, 1.0
        %v944 = vadd.f32 %v906, 1.0
        %v945 = vadd.f32 %v908, 1.0
        %v946 = vadd.f32 %v910, 1.0
        %v947 = vadd.f32 %v912, 1.0
        %v948 = vadd.f32 %v914, 1.0
        %v949 = vadd.f32 %v916, 1.0
        %v950 = vadd.f32 %v918, 1.0
        %v951 = vrcp.pop %v919
        %v952 = vmul.f32 1.0, %v951
        %v953 = vrcp.pop %v920
        %v954 = vmul.f32 1.0, %v953
        %v955 = vrcp.pop %v921
        %v956 = vmul.f32 1.0, %v955
        %v957 = vrcp.pop %v922
        %v958 = vmul.f32 1.0, %v957
        %v959 = vrcp.pop %v923
        %v960 = vmul.f32 1.0, %v959
        %v961 = vrcp.pop %v924
        %v962 = vmul.f32 1.0, %v961
        %v963 = vrcp.pop %v925
        %v964 = vmul.f32 1.0, %v963
        %v965 = vrcp.pop %v926
        %v966 = vmul.f32 1.0, %v965
        %v967 = vrcp.pop %v927
        %v968 = vmul.f32 1.0, %v967
        %v969 = vrcp.pop %v928
        %v970 = vmul.f32 1.0, %v969
        %v971 = vrcp.pop %v929
        %v972 = vmul.f32 1.0, %v971
        %v973 = vrcp.pop %v930
        %v974 = vmul.f32 1.0, %v973
        %v975 = vrcp.pop %v931
        %v976 = vmul.f32 1.0, %v975
        %v977 = vrcp.pop %v932
        %v978 = vmul.f32 1.0, %v977
        %v979 = vrcp.pop %v933
        %v980 = vmul.f32 1.0, %v979
        %v981 = vrcp.pop %v934
        %v982 = vmul.f32 1.0, %v981
        %v983 = vrcp.pop %v935
        %v984 = vmul.f32 1.0, %v983
        %v985 = vrcp.pop %v936
        %v986 = vmul.f32 1.0, %v985
        %v987 = vrcp.pop %v937
        %v988 = vmul.f32 1.0, %v987
        %v989 = vrcp.pop %v938
        %v990 = vmul.f32 1.0, %v989
        %v991 = vrcp.pop %v939
        %v992 = vmul.f32 1.0, %v991
        %v993 = vrcp.pop %v940
        %v994 = vmul.f32 1.0, %v993
        %v995 = vrcp.pop %v941
        %v996 = vmul.f32 1.0, %v995
        %v997 = vrcp.pop %v942
        %v998 = vmul.f32 1.0, %v997
        %v999 = vrcp.pop %v943
        %v1000 = vmul.f32 1.0, %v999
        %v1001 = vrcp.pop %v944
        %v1002 = vmul.f32 1.0, %v1001
        %v1003 = vrcp.pop %v945
        %v1004 = vmul.f32 1.0, %v1003
        %v1005 = vrcp.pop %v946
        %v1006 = vmul.f32 1.0, %v1005
        %v1007 = vrcp.pop %v947
        %v1008 = vmul.f32 1.0, %v1007
        %v1009 = vrcp.pop %v948
        %v1010 = vmul.f32 1.0, %v1009
        %v1011 = vrcp.pop %v949
        %v1012 = vmul.f32 1.0, %v1011
        %v1013 = vrcp.pop %v950
        %v1014 = vmul.f32 1.0, %v1013
        %v1015 = vmul.f32 %v568, %v952
        %v1016 = vmul.f32 %v570, %v954
        %v1017 = vmul.f32 %v574, %v956
        %v1018 = vmul.f32 %v576, %v958
        %v1019 = vmul.f32 %v580, %v960
        %v1020 = vmul.f32 %v582, %v962
        %v1021 = vmul.f32 %v586, %v964
        %v1022 = vmul.f32 %v588, %v966
        %v1023 = vmul.f32 %v592, %v968
        %v1024 = vmul.f32 %v594, %v970
        %v1025 = vmul.f32 %v598, %v972
        %v1026 = vmul.f32 %v600, %v974
        %v1027 = vmul.f32 %v604, %v976
        %v1028 = vmul.f32 %v606, %v978
        %v1029 = vmul.f32 %v610, %v980
        %v1030 = vmul.f32 %v612, %v982
        %v1031 = vmul.f32 %v616, %v984
        %v1032 = vmul.f32 %v618, %v986
        %v1033 = vmul.f32 %v622, %v988
        %v1034 = vmul.f32 %v624, %v990
        %v1035 = vmul.f32 %v628, %v992
        %v1036 = vmul.f32 %v630, %v994
        %v1037 = vmul.f32 %v634, %v996
        %v1038 = vmul.f32 %v636, %v998
        %v1039 = vmul.f32 %v640, %v1000
        %v1040 = vmul.f32 %v642, %v1002
        %v1041 = vmul.f32 %v646, %v1004
        %v1042 = vmul.f32 %v648, %v1006
        %v1043 = vmul.f32 %v652, %v1008
        %v1044 = vmul.f32 %v654, %v1010
        %v1045 = vmul.f32 %v658, %v1012
        %v1046 = vmul.f32 %v660, %v1014
        %v1047 = vmul.f32 %v1015, %v729
        %v1048 = vmul.f32 %v1016, %v731
        %v1049 = vmul.f32 %v1017, %v735
        %v1050 = vmul.f32 %v1018, %v737
        %v1051 = vmul.f32 %v1019, %v741
        %v1052 = vmul.f32 %v1020, %v743
        %v1053 = vmul.f32 %v1021, %v747
        %v1054 = vmul.f32 %v1022, %v749
        %v1055 = vmul.f32 %v1023, %v753
        %v1056 = vmul.f32 %v1024, %v755
        %v1057 = vmul.f32 %v1025, %v759
        %v1058 = vmul.f32 %v1026, %v761
        %v1059 = vmul.f32 %v1027, %v765
        %v1060 = vmul.f32 %v1028, %v767
        %v1061 = vmul.f32 %v1029, %v771
        %v1062 = vmul.f32 %v1030, %v773
        %v1063 = vmul.f32 %v1031, %v777
        %v1064 = vmul.f32 %v1032, %v779
        %v1065 = vmul.f32 %v1033, %v783
        %v1066 = vmul.f32 %v1034, %v785
        %v1067 = vmul.f32 %v1035, %v789
        %v1068 = vmul.f32 %v1036, %v791
        %v1069 = vmul.f32 %v1037, %v795
        %v1070 = vmul.f32 %v1038, %v797
        %v1071 = vmul.f32 %v1039, %v801
        %v1072 = vmul.f32 %v1040, %v803
        %v1073 = vmul.f32 %v1041, %v807
        %v1074 = vmul.f32 %v1042, %v809
        %v1075 = vmul.f32 %v1043, %v813
        %v1076 = vmul.f32 %v1044, %v815
        %v1077 = vmul.f32 %v1045, %v819
        %v1078 = vmul.f32 %v1046, %v821
        %v1079 = vld [vmem:[#allocation2] sm:$0xff]
        %v1080 = vld [vmem:[#allocation2 + $0x8] sm:$0xff]
        %v1081 = vld [vmem:[#allocation2 + $0x10] sm:$0xff]
        %v1082 = vld [vmem:[#allocation2 + $0x18] sm:$0xff]
        %v1083 = vld [vmem:[#allocation2 + $0x20] sm:$0xff]
        %v1084 = vld [vmem:[#allocation2 + $0x28] sm:$0xff]
        %v1085 = vld [vmem:[#allocation2 + $0x30] sm:$0xff]
        %v1086 = vld [vmem:[#allocation2 + $0x38] sm:$0xff]
        %v1087 = vld [vmem:[#allocation2 + $0x40] sm:$0xff]
        %v1088 = vld [vmem:[#allocation2 + $0x48] sm:$0xff]
        %v1089 = vld [vmem:[#allocation2 + $0x50] sm:$0xff]
        %v1090 = vld [vmem:[#allocation2 + $0x58] sm:$0xff]
        %v1091 = vld [vmem:[#allocation2 + $0x60] sm:$0xff]
        %v1092 = vld [vmem:[#allocation2 + $0x68] sm:$0xff]
        %v1093 = vld [vmem:[#allocation2 + $0x70] sm:$0xff]
        %v1094 = vld [vmem:[#allocation2 + $0x78] sm:$0xff]
        %v1095 = vld [vmem:[#allocation2 + $0x80] sm:$0xff]
        %v1096 = vld [vmem:[#allocation2 + $0x88] sm:$0xff]
        %v1097 = vld [vmem:[#allocation2 + $0x90] sm:$0xff]
        %v1098 = vld [vmem:[#allocation2 + $0x98] sm:$0xff]
        %v1099 = vld [vmem:[#allocation2 + $0xa0] sm:$0xff]
        %v1100 = vld [vmem:[#allocation2 + $0xa8] sm:$0xff]
        %v1101 = vld [vmem:[#allocation2 + $0xb0] sm:$0xff]
        %v1102 = vld [vmem:[#allocation2 + $0xb8] sm:$0xff]
        %v1103 = vld [vmem:[#allocation2 + $0xc0] sm:$0xff]
        %v1104 = vld [vmem:[#allocation2 + $0xc8] sm:$0xff]
        %v1105 = vld [vmem:[#allocation2 + $0xd0] sm:$0xff]
        %v1106 = vld [vmem:[#allocation2 + $0xd8] sm:$0xff]
        %v1107 = vld [vmem:[#allocation2 + $0xe0] sm:$0xff]
        %v1108 = vld [vmem:[#allocation2 + $0xe8] sm:$0xff]
        %v1109 = vld [vmem:[#allocation2 + $0xf0] sm:$0xff]
        %v1110 = vld [vmem:[#allocation2 + $0xf8] sm:$0xff]
        %v1111 = vld [vmem:[%s266] sm:$0xff]
        %v1112 = vld [vmem:[%s266 + $0x8] sm:$0xff]
        %v1113 = vld [vmem:[%s266 + $0x10] sm:$0xff]
        %v1114 = vld [vmem:[%s266 + $0x18] sm:$0xff]
        %v1115 = vld [vmem:[%s266 + $0x20] sm:$0xff]
        %v1116 = vld [vmem:[%s266 + $0x28] sm:$0xff]
        %v1117 = vld [vmem:[%s266 + $0x30] sm:$0xff]
        %v1118 = vld [vmem:[%s266 + $0x38] sm:$0xff]
        %v1119 = vld [vmem:[%s266 + $0x40] sm:$0xff]
        %v1120 = vld [vmem:[%s266 + $0x48] sm:$0xff]
        %v1121 = vld [vmem:[%s266 + $0x50] sm:$0xff]
        %v1122 = vld [vmem:[%s266 + $0x58] sm:$0xff]
        %v1123 = vld [vmem:[%s266 + $0x60] sm:$0xff]
        %v1124 = vld [vmem:[%s266 + $0x68] sm:$0xff]
        %v1125 = vld [vmem:[%s266 + $0x70] sm:$0xff]
        %v1126 = vld [vmem:[%s266 + $0x78] sm:$0xff]
        %v1127 = vld [vmem:[%s266 + $0x80] sm:$0xff]
        %v1128 = vld [vmem:[%s266 + $0x88] sm:$0xff]
        %v1129 = vld [vmem:[%s266 + $0x90] sm:$0xff]
        %v1130 = vld [vmem:[%s266 + $0x98] sm:$0xff]
        %v1131 = vld [vmem:[%s266 + $0xa0] sm:$0xff]
        %v1132 = vld [vmem:[%s266 + $0xa8] sm:$0xff]
        %v1133 = vld [vmem:[%s266 + $0xb0] sm:$0xff]
        %v1134 = vld [vmem:[%s266 + $0xb8] sm:$0xff]
        %v1135 = vld [vmem:[%s266 + $0xc0] sm:$0xff]
        %v1136 = vld [vmem:[%s266 + $0xc8] sm:$0xff]
        %v1137 = vld [vmem:[%s266 + $0xd0] sm:$0xff]
        %v1138 = vld [vmem:[%s266 + $0xd8] sm:$0xff]
        %v1139 = vld [vmem:[%s266 + $0xe0] sm:$0xff]
        %v1140 = vld [vmem:[%s266 + $0xe8] sm:$0xff]
        %v1141 = vld [vmem:[%s266 + $0xf0] sm:$0xff]
        %v1142 = vld [vmem:[%s266 + $0xf8] sm:$0xff]
        %v1143 = vld [vmem:[%s266 + $0x100] sm:$0xff]
        %v1144 = vld [vmem:[%s266 + $0x108] sm:$0xff]
        %v1145 = vld [vmem:[%s266 + $0x110] sm:$0xff]
        %v1146 = vld [vmem:[%s266 + $0x118] sm:$0xff]
        %v1147 = vld [vmem:[%s266 + $0x120] sm:$0xff]
        %v1148 = vld [vmem:[%s266 + $0x128] sm:$0xff]
        %v1149 = vld [vmem:[%s266 + $0x130] sm:$0xff]
        %v1150 = vld [vmem:[%s266 + $0x138] sm:$0xff]
        %v1151 = vld [vmem:[%s266 + $0x140] sm:$0xff]
        %v1152 = vld [vmem:[%s266 + $0x148] sm:$0xff]
        %v1153 = vld [vmem:[%s266 + $0x150] sm:$0xff]
        %v1154 = vld [vmem:[%s266 + $0x158] sm:$0xff]
        %v1155 = vld [vmem:[%s266 + $0x160] sm:$0xff]
        %v1156 = vld [vmem:[%s266 + $0x168] sm:$0xff]
        %v1157 = vld [vmem:[%s266 + $0x170] sm:$0xff]
        %v1158 = vld [vmem:[%s266 + $0x178] sm:$0xff]
        %v1159 = vld [vmem:[%s266 + $0x180] sm:$0xff]
        %v1160 = vld [vmem:[%s266 + $0x188] sm:$0xff]
        %v1161 = vld [vmem:[%s266 + $0x190] sm:$0xff]
        %v1162 = vld [vmem:[%s266 + $0x198] sm:$0xff]
        %v1163 = vld [vmem:[%s266 + $0x1a0] sm:$0xff]
        %v1164 = vld [vmem:[%s266 + $0x1a8] sm:$0xff]
        %v1165 = vld [vmem:[%s266 + $0x1b0] sm:$0xff]
        %v1166 = vld [vmem:[%s266 + $0x1b8] sm:$0xff]
        %v1167 = vld [vmem:[%s266 + $0x1c0] sm:$0xff]
        %v1168 = vld [vmem:[%s266 + $0x1c8] sm:$0xff]
        %v1169 = vld [vmem:[%s266 + $0x1d0] sm:$0xff]
        %v1170 = vld [vmem:[%s266 + $0x1d8] sm:$0xff]
        %v1171 = vld [vmem:[%s266 + $0x1e0] sm:$0xff]
        %v1172 = vld [vmem:[%s266 + $0x1e8] sm:$0xff]
        %v1173 = vld [vmem:[%s266 + $0x1f0] sm:$0xff]
        %v1174 = vld [vmem:[%s266 + $0x1f8] sm:$0xff]
        %1175 = vmatprep.subr.mxu0 %v1142
        %1176 = vmatpush1.msra.mxu0 %v1141
        %1177 = vmatprep.subr.mxu0 %v1140
        %1178 = vmatpush1.msra.mxu0 %v1139
        %1179 = vmatprep.subr.mxu0 %v1138
        %1180 = vmatpush1.msra.mxu0 %v1137
        %1181 = vmatprep.subr.mxu0 %v1136
        %1182 = vmatpush1.msra.mxu0 %v1135
        %1183 = vmatprep.subr.mxu0 %v1134
        %1184 = vmatpush1.msra.mxu0 %v1133
        %1185 = vmatprep.subr.mxu0 %v1132
        %1186 = vmatpush1.msra.mxu0 %v1131
        %1187 = vmatprep.subr.mxu0 %v1130
        %1188 = vmatpush1.msra.mxu0 %v1129
        %1189 = vmatprep.subr.mxu0 %v1128
        %1190 = vmatpush1.msra.mxu0 %v1127
        %1191 = vmatprep.subr.mxu0 %v1126
        %1192 = vmatpush1.msra.mxu0 %v1125
        %1193 = vmatprep.subr.mxu0 %v1124
        %1194 = vmatpush1.msra.mxu0 %v1123
        %1195 = vmatprep.subr.mxu0 %v1122
        %1196 = vmatpush1.msra.mxu0 %v1121
        %1197 = vmatprep.subr.mxu0 %v1120
        %1198 = vmatpush1.msra.mxu0 %v1119
        %1199 = vmatprep.subr.mxu0 %v1118
        %1200 = vmatpush1.msra.mxu0 %v1117
        %1201 = vmatprep.subr.mxu0 %v1116
        %1202 = vmatpush1.msra.mxu0 %v1115
        %1203 = vmatprep.subr.mxu0 %v1114
        %1204 = vmatpush1.msra.mxu0 %v1113
        %1205 = vmatprep.subr.mxu0 %v1112
        %1206 = vmatpush1.msra.mxu0 %v1111
        %1207 = vmatprep.subr.mxu0 %v1174
        %1208 = vmatpush2.msra.mxu0 %v1173
        %1209 = vmatprep.subr.mxu0 %v1172
        %1210 = vmatpush2.msra.mxu0 %v1171
        %1211 = vmatprep.subr.mxu0 %v1170
        %1212 = vmatpush2.msra.mxu0 %v1169
        %1213 = vmatprep.subr.mxu0 %v1168
        %1214 = vmatpush2.msra.mxu0 %v1167
        %1215 = vmatprep.subr.mxu0 %v1166
        %1216 = vmatpush2.msra.mxu0 %v1165
        %1217 = vmatprep.subr.mxu0 %v1164
        %1218 = vmatpush2.msra.mxu0 %v1163
        %1219 = vmatprep.subr.mxu0 %v1162
        %1220 = vmatpush2.msra.mxu0 %v1161
        %1221 = vmatprep.subr.mxu0 %v1160
        %1222 = vmatpush2.msra.mxu0 %v1159
        %1223 = vmatprep.subr.mxu0 %v1158
        %1224 = vmatpush2.msra.mxu0 %v1157
        %1225 = vmatprep.subr.mxu0 %v1156
        %1226 = vmatpush2.msra.mxu0 %v1155
        %1227 = vmatprep.subr.mxu0 %v1154
        %1228 = vmatpush2.msra.mxu0 %v1153
        %1229 = vmatprep.subr.mxu0 %v1152
        %1230 = vmatpush2.msra.mxu0 %v1151
        %1231 = vmatprep.subr.mxu0 %v1150
        %1232 = vmatpush2.msra.mxu0 %v1149
        %1233 = vmatprep.subr.mxu0 %v1148
        %1234 = vmatpush2.msra.mxu0 %v1147
        %1235 = vmatprep.subr.mxu0 %v1146
        %1236 = vmatpush2.msra.mxu0 %v1145
        %1237 = vmatprep.subr.mxu0 %v1144
        %1238 = vmatpush2.msra.mxu0 %v1143
        %1239 = vmatprep.mubr.f32.mxu0 %v1048
        %1240 = vmatmul.mubr.f32.gmra.mxu0 %v1047
        %v1241 = vpop.f32.mrf.mxu0
        %v1242 = vadd.f32 0.0, %v1241
        %v1243 = vpop.f32.mrf.mxu0
        %v1244 = vadd.f32 0.0, %v1243
        %1245 = vmatprep.mubr.f32.mxu0 %v1050
        %1246 = vmatmul.mubr.f32.gmra.mxu0 %v1049
        %v1247 = vpop.f32.mrf.mxu0
        %v1248 = vadd.f32 0.0, %v1247
        %v1249 = vpop.f32.mrf.mxu0
        %v1250 = vadd.f32 0.0, %v1249
        %1251 = vmatprep.mubr.f32.mxu0 %v1052
        %1252 = vmatmul.mubr.f32.gmra.mxu0 %v1051
        %v1253 = vpop.f32.mrf.mxu0
        %v1254 = vadd.f32 0.0, %v1253
        %v1255 = vpop.f32.mrf.mxu0
        %v1256 = vadd.f32 0.0, %v1255
        %1257 = vmatprep.mubr.f32.mxu0 %v1054
        %1258 = vmatmul.mubr.f32.gmra.mxu0 %v1053
        %v1259 = vpop.f32.mrf.mxu0
        %v1260 = vadd.f32 0.0, %v1259
        %v1261 = vpop.f32.mrf.mxu0
        %v1262 = vadd.f32 0.0, %v1261
        %1263 = vmatprep.mubr.f32.mxu0 %v1056
        %1264 = vmatmul.mubr.f32.gmra.mxu0 %v1055
        %v1265 = vpop.f32.mrf.mxu0
        %v1266 = vadd.f32 0.0, %v1265
        %v1267 = vpop.f32.mrf.mxu0
        %v1268 = vadd.f32 0.0, %v1267
        %1269 = vmatprep.mubr.f32.mxu0 %v1058
        %1270 = vmatmul.mubr.f32.gmra.mxu0 %v1057
        %v1271 = vpop.f32.mrf.mxu0
        %v1272 = vadd.f32 0.0, %v1271
        %v1273 = vpop.f32.mrf.mxu0
        %v1274 = vadd.f32 0.0, %v1273
        %1275 = vmatprep.mubr.f32.mxu0 %v1060
        %1276 = vmatmul.mubr.f32.gmra.mxu0 %v1059
        %v1277 = vpop.f32.mrf.mxu0
        %v1278 = vadd.f32 0.0, %v1277
        %v1279 = vpop.f32.mrf.mxu0
        %v1280 = vadd.f32 0.0, %v1279
        %1281 = vmatprep.mubr.f32.mxu0 %v1062
        %1282 = vmatmul.mubr.f32.gmra.mxu0 %v1061
        %v1283 = vpop.f32.mrf.mxu0
        %v1284 = vadd.f32 0.0, %v1283
        %v1285 = vpop.f32.mrf.mxu0
        %v1286 = vadd.f32 0.0, %v1285
        %1287 = vmatprep.mubr.f32.mxu0 %v1064
        %1288 = vmatmul.mubr.f32.gmra.mxu0 %v1063
        %v1289 = vpop.f32.mrf.mxu0
        %v1290 = vadd.f32 0.0, %v1289
        %v1291 = vpop.f32.mrf.mxu0
        %v1292 = vadd.f32 0.0, %v1291
        %1293 = vmatprep.mubr.f32.mxu0 %v1066
        %1294 = vmatmul.mubr.f32.gmra.mxu0 %v1065
        %v1295 = vpop.f32.mrf.mxu0
        %v1296 = vadd.f32 0.0, %v1295
        %v1297 = vpop.f32.mrf.mxu0
        %v1298 = vadd.f32 0.0, %v1297
        %1299 = vmatprep.mubr.f32.mxu0 %v1068
        %1300 = vmatmul.mubr.f32.gmra.mxu0 %v1067
        %v1301 = vpop.f32.mrf.mxu0
        %v1302 = vadd.f32 0.0, %v1301
        %v1303 = vpop.f32.mrf.mxu0
        %v1304 = vadd.f32 0.0, %v1303
        %1305 = vmatprep.mubr.f32.mxu0 %v1070
        %1306 = vmatmul.mubr.f32.gmra.mxu0 %v1069
        %v1307 = vpop.f32.mrf.mxu0
        %v1308 = vadd.f32 0.0, %v1307
        %v1309 = vpop.f32.mrf.mxu0
        %v1310 = vadd.f32 0.0, %v1309
        %1311 = vmatprep.mubr.f32.mxu0 %v1072
        %1312 = vmatmul.mubr.f32.gmra.mxu0 %v1071
        %v1313 = vpop.f32.mrf.mxu0
        %v1314 = vadd.f32 0.0, %v1313
        %v1315 = vpop.f32.mrf.mxu0
        %v1316 = vadd.f32 0.0, %v1315
        %1317 = vmatprep.mubr.f32.mxu0 %v1074
        %1318 = vmatmul.mubr.f32.gmra.mxu0 %v1073
        %v1319 = vpop.f32.mrf.mxu0
        %v1320 = vadd.f32 0.0, %v1319
        %v1321 = vpop.f32.mrf.mxu0
        %v1322 = vadd.f32 0.0, %v1321
        %1323 = vmatprep.mubr.f32.mxu0 %v1076
        %1324 = vmatmul.mubr.f32.gmra.mxu0 %v1075
        %v1325 = vpop.f32.mrf.mxu0
        %v1326 = vadd.f32 0.0, %v1325
        %v1327 = vpop.f32.mrf.mxu0
        %v1328 = vadd.f32 0.0, %v1327
        %1329 = vmatprep.mubr.f32.mxu0 %v1078
        %1330 = vmatmul.mubr.f32.gmra.mxu0 %v1077
        %v1331 = vpop.f32.mrf.mxu0
        %v1332 = vadd.f32 0.0, %v1331
        %v1333 = vpop.f32.mrf.mxu0
        %v1334 = vadd.f32 0.0, %v1333
        %1335 = vdwg.mxu0
        %v1336 = vadd.f32 %v1079, %v1242
        %v1337 = vadd.f32 %v1080, %v1244
        %v1338 = vadd.f32 %v1081, %v1248
        %v1339 = vadd.f32 %v1082, %v1250
        %v1340 = vadd.f32 %v1083, %v1254
        %v1341 = vadd.f32 %v1084, %v1256
        %v1342 = vadd.f32 %v1085, %v1260
        %v1343 = vadd.f32 %v1086, %v1262
        %v1344 = vadd.f32 %v1087, %v1266
        %v1345 = vadd.f32 %v1088, %v1268
        %v1346 = vadd.f32 %v1089, %v1272
        %v1347 = vadd.f32 %v1090, %v1274
        %v1348 = vadd.f32 %v1091, %v1278
        %v1349 = vadd.f32 %v1092, %v1280
        %v1350 = vadd.f32 %v1093, %v1284
        %v1351 = vadd.f32 %v1094, %v1286
        %v1352 = vadd.f32 %v1095, %v1290
        %v1353 = vadd.f32 %v1096, %v1292
        %v1354 = vadd.f32 %v1097, %v1296
        %v1355 = vadd.f32 %v1098, %v1298
        %v1356 = vadd.f32 %v1099, %v1302
        %v1357 = vadd.f32 %v1100, %v1304
        %v1358 = vadd.f32 %v1101, %v1308
        %v1359 = vadd.f32 %v1102, %v1310
        %v1360 = vadd.f32 %v1103, %v1314
        %v1361 = vadd.f32 %v1104, %v1316
        %v1362 = vadd.f32 %v1105, %v1320
        %v1363 = vadd.f32 %v1106, %v1322
        %v1364 = vadd.f32 %v1107, %v1326
        %v1365 = vadd.f32 %v1108, %v1328
        %v1366 = vadd.f32 %v1109, %v1332
        %v1367 = vadd.f32 %v1110, %v1334
        %1368 = vst [vmem:[#allocation2] sm:$0xff] %v1336
        %1369 = vst [vmem:[#allocation2 + $0x8] sm:$0xff] %v1337
        %1370 = vst [vmem:[#allocation2 + $0x10] sm:$0xff] %v1338
        %1371 = vst [vmem:[#allocation2 + $0x18] sm:$0xff] %v1339
        %1372 = vst [vmem:[#allocation2 + $0x20] sm:$0xff] %v1340
        %1373 = vst [vmem:[#allocation2 + $0x28] sm:$0xff] %v1341
        %1374 = vst [vmem:[#allocation2 + $0x30] sm:$0xff] %v1342
        %1375 = vst [vmem:[#allocation2 + $0x38] sm:$0xff] %v1343
        %1376 = vst [vmem:[#allocation2 + $0x40] sm:$0xff] %v1344
        %1377 = vst [vmem:[#allocation2 + $0x48] sm:$0xff] %v1345
        %1378 = vst [vmem:[#allocation2 + $0x50] sm:$0xff] %v1346
        %1379 = vst [vmem:[#allocation2 + $0x58] sm:$0xff] %v1347
        %1380 = vst [vmem:[#allocation2 + $0x60] sm:$0xff] %v1348
        %1381 = vst [vmem:[#allocation2 + $0x68] sm:$0xff] %v1349
        %1382 = vst [vmem:[#allocation2 + $0x70] sm:$0xff] %v1350
        %1383 = vst [vmem:[#allocation2 + $0x78] sm:$0xff] %v1351
        %1384 = vst [vmem:[#allocation2 + $0x80] sm:$0xff] %v1352
        %1385 = vst [vmem:[#allocation2 + $0x88] sm:$0xff] %v1353
        %1386 = vst [vmem:[#allocation2 + $0x90] sm:$0xff] %v1354
        %1387 = vst [vmem:[#allocation2 + $0x98] sm:$0xff] %v1355
        %1388 = vst [vmem:[#allocation2 + $0xa0] sm:$0xff] %v1356
        %1389 = vst [vmem:[#allocation2 + $0xa8] sm:$0xff] %v1357
        %1390 = vst [vmem:[#allocation2 + $0xb0] sm:$0xff] %v1358
        %1391 = vst [vmem:[#allocation2 + $0xb8] sm:$0xff] %v1359
        %1392 = vst [vmem:[#allocation2 + $0xc0] sm:$0xff] %v1360
        %1393 = vst [vmem:[#allocation2 + $0xc8] sm:$0xff] %v1361
        %1394 = vst [vmem:[#allocation2 + $0xd0] sm:$0xff] %v1362
        %1395 = vst [vmem:[#allocation2 + $0xd8] sm:$0xff] %v1363
        %1396 = vst [vmem:[#allocation2 + $0xe0] sm:$0xff] %v1364
        %1397 = vst [vmem:[#allocation2 + $0xe8] sm:$0xff] %v1365
        %1398 = vst [vmem:[#allocation2 + $0xf0] sm:$0xff] %v1366
        %1399 = vst [vmem:[#allocation2 + $0xf8] sm:$0xff] %v1367
        %p1400 = scmp.eq.s32.totalorder %s33, 1
        // Predicated region
        $region49: #{tpu_custom_call.1} parent=31 // pred_check
          %p1401 = pneg %p1400
        $region50: #{tpu_custom_call.1} parent=31 // pred_check_branch
          %1403 = sbr.rel (%p1401) target = $region52
        $region51: #{tpu_custom_call.1} parent=31 // pred_region
          %v1404 = vld [vmem:[#allocation2] sm:$0xff]
          %v1405 = vld [vmem:[#allocation2 + $0x8] sm:$0xff]
          %v1406 = vld [vmem:[#allocation2 + $0x10] sm:$0xff]
          %v1407 = vld [vmem:[#allocation2 + $0x18] sm:$0xff]
          %v1408 = vld [vmem:[#allocation2 + $0x20] sm:$0xff]
          %v1409 = vld [vmem:[#allocation2 + $0x28] sm:$0xff]
          %v1410 = vld [vmem:[#allocation2 + $0x30] sm:$0xff]
          %v1411 = vld [vmem:[#allocation2 + $0x38] sm:$0xff]
          %v1412 = vld [vmem:[#allocation2 + $0x40] sm:$0xff]
          %v1413 = vld [vmem:[#allocation2 + $0x48] sm:$0xff]
          %v1414 = vld [vmem:[#allocation2 + $0x50] sm:$0xff]
          %v1415 = vld [vmem:[#allocation2 + $0x58] sm:$0xff]
          %v1416 = vld [vmem:[#allocation2 + $0x60] sm:$0xff]
          %v1417 = vld [vmem:[#allocation2 + $0x68] sm:$0xff]
          %v1418 = vld [vmem:[#allocation2 + $0x70] sm:$0xff]
          %v1419 = vld [vmem:[#allocation2 + $0x78] sm:$0xff]
          %v1420 = vld [vmem:[#allocation2 + $0x80] sm:$0xff]
          %v1421 = vld [vmem:[#allocation2 + $0x88] sm:$0xff]
          %v1422 = vld [vmem:[#allocation2 + $0x90] sm:$0xff]
          %v1423 = vld [vmem:[#allocation2 + $0x98] sm:$0xff]
          %v1424 = vld [vmem:[#allocation2 + $0xa0] sm:$0xff]
          %v1425 = vld [vmem:[#allocation2 + $0xa8] sm:$0xff]
          %v1426 = vld [vmem:[#allocation2 + $0xb0] sm:$0xff]
          %v1427 = vld [vmem:[#allocation2 + $0xb8] sm:$0xff]
          %v1428 = vld [vmem:[#allocation2 + $0xc0] sm:$0xff]
          %v1429 = vld [vmem:[#allocation2 + $0xc8] sm:$0xff]
          %v1430 = vld [vmem:[#allocation2 + $0xd0] sm:$0xff]
          %v1431 = vld [vmem:[#allocation2 + $0xd8] sm:$0xff]
          %v1432 = vld [vmem:[#allocation2 + $0xe0] sm:$0xff]
          %v1433 = vld [vmem:[#allocation2 + $0xe8] sm:$0xff]
          %v1434 = vld [vmem:[#allocation2 + $0xf0] sm:$0xff]
          %v1435 = vld [vmem:[#allocation2 + $0xf8] sm:$0xff]
          %1436 = vst [vmem:[%s298] sm:$0xff] %v1404
          %1437 = vst [vmem:[%s298 + $0x8] sm:$0xff] %v1405
          %1438 = vst [vmem:[%s298 + $0x10] sm:$0xff] %v1406
          %1439 = vst [vmem:[%s298 + $0x18] sm:$0xff] %v1407
          %1440 = vst [vmem:[%s298 + $0x20] sm:$0xff] %v1408
          %1441 = vst [vmem:[%s298 + $0x28] sm:$0xff] %v1409
          %1442 = vst [vmem:[%s298 + $0x30] sm:$0xff] %v1410
          %1443 = vst [vmem:[%s298 + $0x38] sm:$0xff] %v1411
          %1444 = vst [vmem:[%s298 + $0x40] sm:$0xff] %v1412
          %1445 = vst [vmem:[%s298 + $0x48] sm:$0xff] %v1413
          %1446 = vst [vmem:[%s298 + $0x50] sm:$0xff] %v1414
          %1447 = vst [vmem:[%s298 + $0x58] sm:$0xff] %v1415
          %1448 = vst [vmem:[%s298 + $0x60] sm:$0xff] %v1416
          %1449 = vst [vmem:[%s298 + $0x68] sm:$0xff] %v1417
          %1450 = vst [vmem:[%s298 + $0x70] sm:$0xff] %v1418
          %1451 = vst [vmem:[%s298 + $0x78] sm:$0xff] %v1419
          %1452 = vst [vmem:[%s298 + $0x80] sm:$0xff] %v1420
          %1453 = vst [vmem:[%s298 + $0x88] sm:$0xff] %v1421
          %1454 = vst [vmem:[%s298 + $0x90] sm:$0xff] %v1422
          %1455 = vst [vmem:[%s298 + $0x98] sm:$0xff] %v1423
          %1456 = vst [vmem:[%s298 + $0xa0] sm:$0xff] %v1424
          %1457 = vst [vmem:[%s298 + $0xa8] sm:$0xff] %v1425
          %1458 = vst [vmem:[%s298 + $0xb0] sm:$0xff] %v1426
          %1459 = vst [vmem:[%s298 + $0xb8] sm:$0xff] %v1427
          %1460 = vst [vmem:[%s298 + $0xc0] sm:$0xff] %v1428
          %1461 = vst [vmem:[%s298 + $0xc8] sm:$0xff] %v1429
          %1462 = vst [vmem:[%s298 + $0xd0] sm:$0xff] %v1430
          %1463 = vst [vmem:[%s298 + $0xd8] sm:$0xff] %v1431
          %1464 = vst [vmem:[%s298 + $0xe0] sm:$0xff] %v1432
          %1465 = vst [vmem:[%s298 + $0xe8] sm:$0xff] %v1433
          %1466 = vst [vmem:[%s298 + $0xf0] sm:$0xff] %v1434
          %1467 = vst [vmem:[%s298 + $0xf8] sm:$0xff] %v1435
        $region52: #{tpu_custom_call.1} parent=31 // pred_fallthru
          _
        %s1468 = sand.u32 %s134, 1
        %s1469 = scalar_lea.sflag [#allocation7], %s1468
        %s1470 = sand.u32 %s134, 1
        %s1471 = smul.addr %s1470, 256
        %s1472 = scalar_lea.vmem [#allocation11], %s1471
        // Predicated region
        $region53: #{tpu_custom_call.1} parent=31 // pred_check
          %p1473 = pneg %p144
        $region54: #{tpu_custom_call.1} parent=31 // pred_check_branch
          %1475 = sbr.rel (%p1473) target = $region56
        $region55: #{tpu_custom_call.1} parent=31 // pred_region
          %s1476 = smul.u32 16, %s32
          %s1478 = ssub.s32 4096, 4096
          %1479 = vsyncadd %s1469, %s1478
          %s1480 = smul.addr %s1476, 2
          %s1481 = smul.addr %s1480, 128
          %s1482 = scalar_lea.hbm %s4, %s1481
          %s1483 = sshll.u32 %s1472, 4
          %s1484 = int_to_ptr.vmem [resolvable:$true] %s1483
          %1489 = dma.vmem_to_hbm [thread:$0]  %s1484, 4096, %s1482, %s1469, 256, 256, 16
        $region56: #{tpu_custom_call.1} parent=31 // pred_fallthru
          _
      $region32: #{tpu_custom_call.1} parent=5 // pred_fallthru
        _
      %p1490 = scmp.le.s32.totalorder 2, %s23
      // Predicated region
      $region57: #{tpu_custom_call.1} parent=5 // pred_check
        %p1491 = pneg %p1490
      $region58: #{tpu_custom_call.1} parent=5 // pred_check_branch
        %1493 = sbr.rel (%p1491) target = $region60
      $region59: #{tpu_custom_call.1} parent=5 // pred_region
        %s1494 = ssub.s32 %s23, 2
        // Predicated region
        $region61: #{tpu_custom_call.1} parent=59 // pred_check
          %p1495 = pneg %p150
        $region62: #{tpu_custom_call.1} parent=59 // pred_check_branch
          %1497 = sbr.rel (%p1495) target = $region64
        $region63: #{tpu_custom_call.1} parent=59 // pred_region
          %s1498 = sand.u32 %s135, 1
          %s1499 = scalar_lea.sflag [#allocation7], %s1498
          %s1500 = sand.u32 %s135, 1
          %s1501 = smul.addr %s1500, 256
          %s1502 = scalar_lea.vmem [#allocation11], %s1501
          %1503 = dma.done %s1499, 4096
        $region64: #{tpu_custom_call.1} parent=59 // pred_fallthru
          _
      $region60: #{tpu_custom_call.1} parent=5 // pred_fallthru
        _
    $region6: #{tpu_custom_call.1} parent=1 // loop_footer
      %s27 = sadd.s32 1, %s23
    $region7: #{tpu_custom_call.1} parent=1 // loop_footer_branch
      %22 = sbr.rel target = $region3
    $region8: #{tpu_custom_call.1} parent=1 // loop_exit
      _
    %1504 = vsyncpa [#allocation6], 1
    %s1505 = scalar_lea.sflag [#allocation6], 1
    %1506 = vsyncpa %s1505, 1
    %1507 = vsyncpa [#allocation9], 1
    %s1508 = scalar_lea.sflag [#allocation9], 1
    %1509 = vsyncpa %s1508, 1
    %1510 = vsyncpa [#allocation7], 1
    %s1511 = scalar_lea.sflag [#allocation7], 1
    %1512 = vsyncpa %s1511, 1

</llo_original>
